<compile_context>
chip_gen: v7x
topology: tpu7x:2x2x1
jax: 0.10.0
libtpu: 0.0.40
codegen_flags: <defaults>
</compile_context>

<pallas_src>
import functools

import jax
import jax.numpy as jnp
from jax.experimental import pallas as pl
from jax.experimental.pallas import tpu as pltpu

LANE = 128
SUBLANE = 8


def _pad_axis(x, axis, multiple):
    pad = (-x.shape[axis]) % multiple
    if pad == 0:
        return x
    widths = [(0, 0)] * x.ndim
    widths[axis] = (0, pad)
    return jnp.pad(x, widths)


# --------------------------- pass 1: per-metapath logit sums ---------------------------
def _logit_sum_kernel(z_ref, w1_ref, b1_ref, w2_ref, s_ref, *, n_total, use_bf16):
    i = pl.program_id(0)

    @pl.when(i == 0)
    def _():
        s_ref[...] = jnp.zeros_like(s_ref)

    zb = z_ref[...]                                   # (M, Nt, D) f32
    M, Nt, D = zb.shape
    H = w1_ref.shape[1]

    # (M, Nt, D) -> (M*Nt, D) is layout-free: Nt % 8 == 0 and D % 128 == 0.
    z2 = zb.reshape(M * Nt, D)
    w1 = w1_ref[...]
    if use_bf16:                                      # MXU fast path (v6e/v7x); f32 accum
        z2 = z2.astype(jnp.bfloat16)
        w1 = w1.astype(jnp.bfloat16)

    h = jnp.tanh(
        jnp.dot(z2, w1, preferred_element_type=jnp.float32) + b1_ref[...]
    )                                                 # (M*Nt, H) f32, tanh on EUP

    # Linear(H -> 1, bias=False) as VPU mul + lane reduce (avoids a width-1 MXU pass).
    t = h * w2_ref[...]                               # (M*Nt, H)
    s_mn = jnp.sum(t.reshape(M, Nt, H), axis=2)       # (M, Nt) per-node logits

    # Mask rows past the true N (ragged last tile); zero rows would otherwise
    # contribute tanh(b1) @ w2 to the mean.
    n_idx = i * Nt + jax.lax.broadcasted_iota(jnp.int32, (1, Nt), 1)
    s_mn = jnp.where(n_idx < n_total, s_mn, 0.0)

    s_ref[...] += jnp.sum(s_mn, axis=1, keepdims=True)   # (M, 1) accumulator


# --------------------------- pass 2: beta-weighted sum over metapaths ------------------
def _weighted_sum_kernel(z_ref, beta_ref, out_ref):
    zb = z_ref[...]                                   # (M, Nt, D)
    beta = beta_ref[...]                              # (M, 1, 1)
    out_ref[...] = jnp.sum(zb * beta, axis=0)         # (Nt, D) lane-dense store


@functools.partial(jax.jit, static_argnames=("block_n", "use_bf16_matmul"))
def semantic_attention(z, w1, b1, w2, *, block_n=128, use_bf16_matmul=False):
    """
    z : (N, M, D) f32   nodes x metapaths x features
    w1: (D, H)    f32   first Linear weight (PyTorch weight transposed)
    b1: (1, H)    f32   first Linear bias
    w2: (1, H)    f32   second Linear (H -> 1, no bias) weight (PyTorch layout)
    returns (out (N, D) f32, beta (M, 1) f32)
    """
    N, M, D = z.shape
    H = w1.shape[1]

    # ---- lane-dense padding of D and H (zero padding is mathematically exact) ----
    zt = jnp.transpose(z, (1, 0, 2))                  # (M, N, D) metapath-major
    zt = _pad_axis(zt, 2, LANE)
    w1p = _pad_axis(_pad_axis(w1, 0, LANE), 1, LANE)
    b1p = _pad_axis(b1, 1, LANE)
    w2p = _pad_axis(w2, 1, LANE)
    Dp = zt.shape[2]
    Hp = w1p.shape[1]

    # ---- tile N (multiple of 8 sublanes); pad the ragged tail with zeros ----
    block_n = max(SUBLANE, (int(block_n) // SUBLANE) * SUBLANE)
    num_tiles = pl.cdiv(N, block_n)
    Np = num_tiles * block_n
    zt = _pad_axis(zt, 1, block_n)                    # (M, Np, Dp)

    z_bytes = int(zt.size) * 4
    w_bytes = (int(w1p.size) + int(b1p.size) + int(w2p.size)) * 4

    # ------------------------------ pass 1 ------------------------------
    logit_sum = pl.pallas_call(
        functools.partial(_logit_sum_kernel, n_total=N, use_bf16=use_bf16_matmul),
        grid=(num_tiles,),
        in_specs=[
            pl.BlockSpec((M, block_n, Dp), lambda i: (0, i, 0)),
            pl.BlockSpec((Dp, Hp), lambda i: (0, 0)),
            pl.BlockSpec((1, Hp), lambda i: (0, 0)),
            pl.BlockSpec((1, Hp), lambda i: (0, 0)),
        ],
        out_specs=pl.BlockSpec((M, 1), lambda i: (0, 0)),   # revisited accumulator block
        out_shape=jax.ShapeDtypeStruct((M, 1), jnp.float32),
        compiler_params=pltpu.CompilerParams(
            dimension_semantics=("arbitrary",),              # reduction over N tiles
            vmem_limit_bytes=32 * 1024 * 1024,
        ),
        cost_estimate=pl.CostEstimate(
            flops=2 * M * Np * Dp * Hp + 4 * M * Np * Hp,
            transcendentals=M * Np * Hp,
            bytes_accessed=z_bytes + w_bytes + M * 4,
        ),
    )(zt, w1p, b1p, w2p)                                     # (M, 1)

    # Tiny global finalize: mean over the *true* N, softmax over metapaths.
    beta = jax.nn.softmax(logit_sum / N, axis=0)             # (M, 1)

    # ------------------------------ pass 2 ------------------------------
    out_pad = pl.pallas_call(
        _weighted_sum_kernel,
        grid=(num_tiles,),
        in_specs=[
            pl.BlockSpec((M, block_n, Dp), lambda i: (0, i, 0)),
            pl.BlockSpec((M, 1, 1), lambda i: (0, 0, 0)),
        ],
        out_specs=pl.BlockSpec((block_n, Dp), lambda i: (i, 0)),
        out_shape=jax.ShapeDtypeStruct((Np, Dp), jnp.float32),
        compiler_params=pltpu.CompilerParams(
            dimension_semantics=("parallel",),               # shard across TensorCores
            vmem_limit_bytes=32 * 1024 * 1024,
        ),
        cost_estimate=pl.CostEstimate(
            flops=2 * M * Np * Dp,
            transcendentals=0,
            bytes_accessed=z_bytes + M * 4 + Np * Dp * 4,
        ),
    )(zt, beta.reshape(M, 1, 1))                             # (Np, Dp)

    return out_pad[:N, :D], beta


def reference(z, w1, b1, w2):
    # Pure-JAX reference mirroring the PyTorch forward.
    proj = jnp.tanh(jnp.einsum("nmd,dh->nmh", z, w1) + b1.reshape(1, 1, -1))
    w = jnp.einsum("nmh,h->nm", proj, w2[0])[..., None]      # (N, M, 1)
    w = jnp.mean(w, axis=0)                                  # (M, 1)
    beta = jax.nn.softmax(w, axis=0)                         # (M, 1)
    out = jnp.sum(beta[None, :, :] * z, axis=1)              # (N, D)
    return out, beta


if __name__ == "__main__":
    # nodes, metapaths, in_size, hidden_size (module default hidden_size=128).
    # N is intentionally NOT a multiple of the N-tile to exercise the ragged-tile mask.
    N, M, D, H = 300, 4, 128, 128

    key = jax.random.PRNGKey(0)
    k_z, k_w1, k_b1, k_w2 = jax.random.split(key, 4)

    z = jax.random.normal(k_z, (N, M, D), dtype=jnp.float32)
    # nn.Linear(D, H): weight (H, D), bias (H) -> pass transposed weight (D, H), bias (1, H)
    w1 = jax.random.normal(k_w1, (D, H), dtype=jnp.float32) * 0.1
    b1 = jax.random.normal(k_b1, (1, H), dtype=jnp.float32) * 0.1
    # nn.Linear(H, 1, bias=False): weight (1, H) -> passed as-is (kernel does mul + reduce)
    w2 = jax.random.normal(k_w2, (1, H), dtype=jnp.float32) * 0.1

    out, beta = semantic_attention(z, w1, b1, w2)
    jax.block_until_ready((out, beta))

    out_ref, beta_ref = reference(z, w1, b1, w2)
    assert out.shape == (N, D) and beta.shape == (M, 1)
    # Tolerances allow for MXU matmul-precision / accumulation-order differences between
    # the Pallas dot and the XLA einsum reference (both mathematically f32).
    assert jnp.allclose(out, out_ref, atol=1e-3, rtol=1e-3), float(jnp.max(jnp.abs(out - out_ref)))
    assert jnp.allclose(beta, beta_ref, atol=5e-4, rtol=1e-3), float(jnp.max(jnp.abs(beta - beta_ref)))
    assert jnp.allclose(jnp.sum(beta), 1.0, atol=1e-5)

    print("KERNEL_OK")
</pallas_src>

<mosaic_0001>
module attributes {stable_mosaic.version = 11 : i64} {
  func.func @_logit_sum_kernel(%arg0: i32, %arg1: memref<4x128x128xf32, #tpu.memory_space<vmem>>, %arg2: memref<128x128xf32, #tpu.memory_space<vmem>>, %arg3: memref<1x128xf32, #tpu.memory_space<vmem>>, %arg4: memref<1x128xf32, #tpu.memory_space<vmem>>, %arg5: memref<4x1xf32, #tpu.memory_space<vmem>>) attributes {dimension_semantics = [#tpu.dimension_semantics<arbitrary>], iteration_bounds = array<i64: 3>, scalar_prefetch = 0 : i64, scratch_operands = 0 : i64, tpu.core_type = #tpu.core_type<tc>, window_params = [{transform_indices = @transform_0, window_bounds = array<i64: 4, 128, 128>}, {pipeline_mode = #tpu.pipeline_mode<synchronous>, transform_indices = @transform_1, window_bounds = array<i64: 128, 128>}, {pipeline_mode = #tpu.pipeline_mode<synchronous>, transform_indices = @transform_2, window_bounds = array<i64: 1, 128>}, {pipeline_mode = #tpu.pipeline_mode<synchronous>, transform_indices = @transform_3, window_bounds = array<i64: 1, 128>}, {pipeline_mode = #tpu.pipeline_mode<synchronous>, transform_indices = @transform_4, window_bounds = array<i64: 4, 1>}]} {
    %c0_i32 = arith.constant 0 : i32
    %0 = arith.cmpi eq, %arg0, %c0_i32 : i32
    %1 = arith.extui %0 : i1 to i32
    %c0_i32_0 = arith.constant 0 : i32
    %2 = arith.cmpi ne, %1, %c0_i32_0 : i32
    scf.if %2 {
      %cst_16 = arith.constant 0.000000e+00 : f32
      %31 = vector.broadcast %cst_16 : f32 to vector<4x1xf32>
      %c0_17 = arith.constant 0 : index
      %c0_18 = arith.constant 0 : index
      %32 = vector.load %arg5[%c0_17, %c0_18] : memref<4x1xf32, #tpu.memory_space<vmem>>, vector<4x1xf32>
      tpu.vector_store %arg5[%c0_17, %c0_18], %31 {strides = array<i32>} : memref<4x1xf32, #tpu.memory_space<vmem>>, vector<4x1xf32>,
    } else {
    }
    %c0 = arith.constant 0 : index
    %c0_1 = arith.constant 0 : index
    %c0_2 = arith.constant 0 : index
    %3 = vector.load %arg1[%c0, %c0_1, %c0_2] : memref<4x128x128xf32, #tpu.memory_space<vmem>>, vector<4x128x128xf32>
    %4 = vector.shape_cast %3 : vector<4x128x128xf32> to vector<512x128xf32>
    %c0_3 = arith.constant 0 : index
    %c0_4 = arith.constant 0 : index
    %5 = vector.load %arg2[%c0_3, %c0_4] : memref<128x128xf32, #tpu.memory_space<vmem>>, vector<128x128xf32>
    %cst = arith.constant dense<0.000000e+00> : vector<512x128xf32>
    %6 = tpu.matmul %4, %5, %cst {dimension_numbers = #tpu.dot_dimension_numbers<[1], [0], [0], [1], [0, 0, 1, 1], [], []>} : vector<512x128xf32>, vector<128x128xf32>, vector<512x128xf32> -> vector<512x128xf32>
    %c0_5 = arith.constant 0 : index
    %c0_6 = arith.constant 0 : index
    %7 = vector.load %arg3[%c0_5, %c0_6] : memref<1x128xf32, #tpu.memory_space<vmem>>, vector<1x128xf32>
    %8 = vector.broadcast %7 : vector<1x128xf32> to vector<512x128xf32>
    %9 = arith.addf %6, %8 : vector<512x128xf32>
    %10 = math.tanh %9 : vector<512x128xf32>
    %c0_7 = arith.constant 0 : index
    %c0_8 = arith.constant 0 : index
    %11 = vector.load %arg4[%c0_7, %c0_8] : memref<1x128xf32, #tpu.memory_space<vmem>>, vector<1x128xf32>
    %12 = vector.broadcast %11 : vector<1x128xf32> to vector<512x128xf32>
    %13 = arith.mulf %10, %12 : vector<512x128xf32>
    %14 = vector.shape_cast %13 : vector<512x128xf32> to vector<4x128x128xf32>
    %cst_9 = arith.constant dense<0.000000e+00> : vector<4x128xf32>
    %15 = vector.multi_reduction <add>, %14, %cst_9 [2] : vector<4x128x128xf32> to vector<4x128xf32>
    %c128_i32 = arith.constant 128 : i32
    %16 = arith.muli %arg0, %c128_i32 : i32
    %17 = tpu.iota {dimensions = array<i32: 1>} : vector<1x128xi32>
    %18 = vector.broadcast %16 : i32 to vector<1x128xi32>
    %19 = arith.addi %18, %17 : vector<1x128xi32>
    %c300_i32 = arith.constant 300 : i32
    %20 = vector.broadcast %c300_i32 : i32 to vector<1x128xi32>
    %21 = arith.cmpi slt, %19, %20 : vector<1x128xi32>
    %cst_10 = arith.constant 0.000000e+00 : f32
    %22 = vector.shape_cast %21 : vector<1x128xi1> to vector<1x128xi1>
    %23 = vector.broadcast %22 : vector<1x128xi1> to vector<4x128xi1>
    %24 = vector.broadcast %cst_10 : f32 to vector<4x128xf32>
    %25 = arith.select %23, %15, %24 : vector<4x128xi1>, vector<4x128xf32>
    %c0_11 = arith.constant 0 : index
    %c0_12 = arith.constant 0 : index
    %26 = vector.load %arg5[%c0_11, %c0_12] : memref<4x1xf32, #tpu.memory_space<vmem>>, vector<4x1xf32>
    %cst_13 = arith.constant dense<0.000000e+00> : vector<4xf32>
    %27 = vector.multi_reduction <add>, %25, %cst_13 [1] : vector<4x128xf32> to vector<4xf32>
    %28 = vector.shape_cast %27 : vector<4xf32> to vector<4x1xf32>
    %29 = arith.addf %26, %28 : vector<4x1xf32>
    %c0_14 = arith.constant 0 : index
    %c0_15 = arith.constant 0 : index
    %30 = vector.load %arg5[%c0_14, %c0_15] : memref<4x1xf32, #tpu.memory_space<vmem>>, vector<4x1xf32>
    tpu.vector_store %arg5[%c0_14, %c0_15], %29 {strides = array<i32>} : memref<4x1xf32, #tpu.memory_space<vmem>>, vector<4x1xf32>,
    return
  }
  func.func @transform_0(%arg0: i32) -> (i32, i32, i32) {
    %c0_i32 = arith.constant 0 : i32
    %c0_i32_0 = arith.constant 0 : i32
    %c0_i32_1 = arith.constant 0 : i32
    return %c0_i32, %arg0, %c0_i32_0 : i32, i32, i32
  }
  func.func @transform_1(%arg0: i32) -> (i32, i32) {
    %c0_i32 = arith.constant 0 : i32
    %c0_i32_0 = arith.constant 0 : i32
    %c0_i32_1 = arith.constant 0 : i32
    return %c0_i32, %c0_i32_0 : i32, i32
  }
  func.func @transform_2(%arg0: i32) -> (i32, i32) {
    %c0_i32 = arith.constant 0 : i32
    %c0_i32_0 = arith.constant 0 : i32
    %c0_i32_1 = arith.constant 0 : i32
    return %c0_i32, %c0_i32_0 : i32, i32
  }
  func.func @transform_3(%arg0: i32) -> (i32, i32) {
    %c0_i32 = arith.constant 0 : i32
    %c0_i32_0 = arith.constant 0 : i32
    %c0_i32_1 = arith.constant 0 : i32
    return %c0_i32, %c0_i32_0 : i32, i32
  }
  func.func @transform_4(%arg0: i32) -> (i32, i32) {
    %c0_i32 = arith.constant 0 : i32
    %c0_i32_0 = arith.constant 0 : i32
    %c0_i32_1 = arith.constant 0 : i32
    return %c0_i32, %c0_i32_0 : i32, i32
  }
}

module attributes {stable_mosaic.version = 11 : i64} {
  func.func @_weighted_sum_kernel(%arg0: i32, %arg1: memref<4x128x128xf32, #tpu.memory_space<vmem>>, %arg2: memref<4x1x1xf32, #tpu.memory_space<vmem>>, %arg3: memref<128x128xf32, #tpu.memory_space<vmem>>) attributes {dimension_semantics = [#tpu.dimension_semantics<parallel>], iteration_bounds = array<i64: 3>, scalar_prefetch = 0 : i64, scratch_operands = 0 : i64, tpu.core_type = #tpu.core_type<tc>, window_params = [{transform_indices = @transform_0, window_bounds = array<i64: 4, 128, 128>}, {pipeline_mode = #tpu.pipeline_mode<synchronous>, transform_indices = @transform_1, window_bounds = array<i64: 4, 1, 1>}, {transform_indices = @transform_2, window_bounds = array<i64: 128, 128>}]} {
    %c0 = arith.constant 0 : index
    %c0_0 = arith.constant 0 : index
    %c0_1 = arith.constant 0 : index
    %0 = vector.load %arg1[%c0, %c0_0, %c0_1] : memref<4x128x128xf32, #tpu.memory_space<vmem>>, vector<4x128x128xf32>
    %c0_2 = arith.constant 0 : index
    %c0_3 = arith.constant 0 : index
    %c0_4 = arith.constant 0 : index
    %1 = vector.load %arg2[%c0_2, %c0_3, %c0_4] : memref<4x1x1xf32, #tpu.memory_space<vmem>>, vector<4x1x1xf32>
    %2 = vector.broadcast %1 : vector<4x1x1xf32> to vector<4x128x128xf32>
    %3 = arith.mulf %0, %2 : vector<4x128x128xf32>
    %cst = arith.constant dense<0.000000e+00> : vector<128x128xf32>
    %4 = vector.multi_reduction <add>, %3, %cst [0] : vector<4x128x128xf32> to vector<128x128xf32>
    %c0_5 = arith.constant 0 : index
    %c0_6 = arith.constant 0 : index
    %5 = vector.load %arg3[%c0_5, %c0_6] : memref<128x128xf32, #tpu.memory_space<vmem>>, vector<128x128xf32>
    tpu.vector_store %arg3[%c0_5, %c0_6], %4 {strides = array<i32>} : memref<128x128xf32, #tpu.memory_space<vmem>>, vector<128x128xf32>,
    return
  }
  func.func @transform_0(%arg0: i32) -> (i32, i32, i32) {
    %c0_i32 = arith.constant 0 : i32
    %c0_i32_0 = arith.constant 0 : i32
    %c0_i32_1 = arith.constant 0 : i32
    return %c0_i32, %arg0, %c0_i32_0 : i32, i32, i32
  }
  func.func @transform_1(%arg0: i32) -> (i32, i32, i32) {
    %c0_i32 = arith.constant 0 : i32
    %c0_i32_0 = arith.constant 0 : i32
    %c0_i32_1 = arith.constant 0 : i32
    %c0_i32_2 = arith.constant 0 : i32
    return %c0_i32, %c0_i32_0, %c0_i32_1 : i32, i32, i32
  }
  func.func @transform_2(%arg0: i32) -> (i32, i32) {
    %c0_i32 = arith.constant 0 : i32
    %c0_i32_0 = arith.constant 0 : i32
    return %arg0, %c0_i32 : i32, i32
  }
}

</mosaic_0001>

<llo_original>
// kernel: semantic_attention.3
$region0: #{semantic_attention.3}
  #allocation0 [shape = 'u32[]', space=smem, size = 0x4, offset = 0x4, fixed_abs, tag = 'smem constant byte address 0x4 - core index']
  #allocation1 [shape = 'u32[144,128]{1,0:T(1,128)}', space=vmem, size = 0x12000, scoped, tag = 'internal scratch']
  %s0 = inlined_call_operand.vmem [shape: f32[4,384,128], index: 0, kind: input, shape index: {}]
  %s1 = inlined_call_operand.vmem [shape: f32[4,1,1], index: 1, kind: input, shape index: {}]
  %s2 = inlined_call_operand.vmem [shape: f32[384,128], index: 2, kind: output, shape index: {}]
  %s3 = sld [smem:[#allocation0]]
  $region79: #{semantic_attention.3} parent=0
    _
  %s5 = ssub.s32 1, %s3
  %s6 = scalar_select 0, %s5, %s3
  $region1: #{semantic_attention.3} parent=0
    #allocation2 [shape = 'u8[524288]{0}', space=vmem, size = 0x80000, scoped, tag = 'input window, operand 0']
    loop: start=0, step=1, limit=5
    $region2: #{semantic_attention.3} parent=1 // loop_pre_header
      _
    $region3: #{semantic_attention.3} parent=1 // loop_header
      %s8 = sphi 0, %s12
      %p9 = scmp.ge.s32.totalorder %s8, 5
      %s18 = sphi 0, %s20
      %s21 = sphi 0, %s18
      %s22 = sphi 0, %s21
      %s38 = sphi 0, %s22
      %s42 = sphi 0, %s42
      %s44 = sphi 0, %s42
      %s45 = sphi 0, %s44
      %s59 = sphi 0, %s45
      %s65 = sphi 0, %s67
      %s68 = sphi 0, %s65
      %s69 = sphi 0, %s68
      %s85 = sphi 0, %s69
    $region4: #{semantic_attention.3} parent=1 // loop_header_branch
      %11 = sbr.rel (%p9) target = $region8
    $region5: #{semantic_attention.3} parent=1 // loop_body
      %s13 = ssub.s32 %s8, 1
      %s14 = ssub.s32 %s8, 2
      %s15 = sadd.s32 %s8, 1
      %s16 = ssub.s32 %s8, %s15
      %p17 = scmp.eq.s32.totalorder %s16, 0
      %s19 = sadd.s32 %s18, 1
      %s20 = scalar_select %p17, %s18, %s19
      %p23 = pneg %p17
      %p24 = scmp.eq.s32.totalorder %s8, 2
      %p25 = por %p23, %p24
      %p26 = scmp.ne.s32.totalorder %s18, %s21
      %p27 = scmp.eq.s32.totalorder %s8, 0
      %p28 = por %p26, %p27
      %p29 = scmp.ne.s32.totalorder %s18, %s21
      %p30 = scmp.eq.s32.totalorder %s13, 2
      %p31 = por %p29, %p30
      %p32 = scmp.ne.s32.totalorder %s21, %s22
      %p33 = scmp.eq.s32.totalorder %s13, 0
      %p34 = por %p32, %p33
      %p35 = scmp.ne.s32.totalorder %s21, %s22
      %p36 = scmp.eq.s32.totalorder %s14, 2
      %p37 = por %p35, %p36
      %p39 = scmp.ne.s32.totalorder %s22, %s38
      %p40 = scmp.eq.s32.totalorder %s14, 0
      %p41 = por %p39, %p40
      %s43 = sadd.s32 %s42, 1
      %p46 = scmp.eq.s32.totalorder %s8, 2
      %p47 = scmp.ne.s32.totalorder %s42, %s44
      %p48 = scmp.eq.s32.totalorder %s8, 0
      %p49 = por %p47, %p48
      %p50 = scmp.ne.s32.totalorder %s42, %s44
      %p51 = scmp.eq.s32.totalorder %s13, 2
      %p52 = por %p50, %p51
      %p53 = scmp.ne.s32.totalorder %s44, %s45
      %p54 = scmp.eq.s32.totalorder %s13, 0
      %p55 = por %p53, %p54
      %p56 = scmp.ne.s32.totalorder %s44, %s45
      %p57 = scmp.eq.s32.totalorder %s14, 2
      %p58 = por %p56, %p57
      %p60 = scmp.ne.s32.totalorder %s45, %s59
      %p61 = scmp.eq.s32.totalorder %s14, 0
      %p62 = por %p60, %p61
      %s63 = ssub.s32 %s8, %s15
      %p64 = scmp.eq.s32.totalorder %s63, 0
      %s66 = sadd.s32 %s65, 1
      %s67 = scalar_select %p64, %s65, %s66
      %p70 = pneg %p64
      %p71 = scmp.eq.s32.totalorder %s8, 2
      %p72 = por %p70, %p71
      %p73 = scmp.ne.s32.totalorder %s65, %s68
      %p74 = scmp.eq.s32.totalorder %s8, 0
      %p75 = por %p73, %p74
      %p76 = scmp.ne.s32.totalorder %s65, %s68
      %p77 = scmp.eq.s32.totalorder %s13, 2
      %p78 = por %p76, %p77
      %p79 = scmp.ne.s32.totalorder %s68, %s69
      %p80 = scmp.eq.s32.totalorder %s13, 0
      %p81 = por %p79, %p80
      %p82 = scmp.ne.s32.totalorder %s68, %s69
      %p83 = scmp.eq.s32.totalorder %s14, 2
      %p84 = por %p82, %p83
      %p86 = scmp.ne.s32.totalorder %s69, %s85
      %p87 = scmp.eq.s32.totalorder %s14, 0
      %p88 = por %p86, %p87
      %p89 = scmp.le.s32.totalorder 1, %s8
      %p90 = scmp.lt.s32.totalorder %s8, 4
      %p91 = pnand %p89, %p90
      %p92 = pneg %p91
      // Predicated region
      $region9: #{semantic_attention.3} parent=5 // pred_check
        _
      $region10: #{semantic_attention.3} parent=5 // pred_check_branch
        %94 = sbr.rel (%p91) target = $region12
      $region11: #{semantic_attention.3} parent=5 // pred_region
        %s95 = ssub.s32 %s8, 1
        // Predicated region
        $region13: #{semantic_attention.3} parent=11 // pred_check
          %p96 = pneg %p55
        $region14: #{semantic_attention.3} parent=11 // pred_check_branch
          %98 = sbr.rel (%p96) target = $region16
        $region15: #{semantic_attention.3} parent=11 // pred_region
          _
        $region16: #{semantic_attention.3} parent=11 // pred_fallthru
          _
      $region12: #{semantic_attention.3} parent=5 // pred_fallthru
        _
      %p99 = scmp.lt.s32.totalorder %s8, 3
      // Predicated region
      $region17: #{semantic_attention.3} parent=5 // pred_check
        %p100 = pneg %p99
      $region18: #{semantic_attention.3} parent=5 // pred_check_branch
        %102 = sbr.rel (%p100) target = $region20
      $region19: #{semantic_attention.3} parent=5 // pred_region
        // Predicated region
        $region21: #{semantic_attention.3} parent=19 // pred_check
          %p103 = pneg %p28
        $region22: #{semantic_attention.3} parent=19 // pred_check_branch
          %105 = sbr.rel (%p103) target = $region24
        $region23: #{semantic_attention.3} parent=19 // pred_region
          %s106 = sand.u32 %s18, 1
          %s107 = sand.u32 %s18, 1
          %s108 = smul.addr %s107, 512
          %s109 = scalar_lea.vmem [#allocation2], %s108
          %s110 = smul.u32 16, %s8
          %s111 = smul.addr %s110, 8
          %s112 = scalar_lea.vmem %s0, %s111
          // Predicated region
          $region25: #{semantic_attention.3} parent=23 // pred_check
            _
          $region26: #{semantic_attention.3} parent=23 // pred_check_branch
            %114 = sbr.rel (0) target = $region28
          $region27: #{semantic_attention.3} parent=23 // pred_region
            // Predicated region
            $region29: #{semantic_attention.3} parent=27 // pred_check
              _
            $region30: #{semantic_attention.3} parent=27 // pred_check_branch
              %116 = sbr.rel (0) target = $region32
            $region31: #{semantic_attention.3} parent=27 // pred_region
              // Predicated region
              $region44: #{semantic_attention.3} parent=31 // pred_check
                _
              $region45: #{semantic_attention.3} parent=31 // pred_check_branch
                %257 = sbr.rel (0) target = $region47
              $region46: #{semantic_attention.3} parent=31 // pred_region
                loop: start=0, step=1, limit=1
                $region48: #{semantic_attention.3} parent=46 // loop_pre_header
                  _
                $region49: #{semantic_attention.3} parent=46 // loop_header
                  %s259 = sphi 0, %s263
                  %p260 = scmp.ge.s32.totalorder %s259, 1
                  %s264 = sphi %s112, %s112
                  %s265 = sphi %s109, %s109
                $region50: #{semantic_attention.3} parent=46 // loop_header_branch
                  %262 = sbr.rel (%p260) target = $region54
                $region51: #{semantic_attention.3} parent=46 // loop_body
                  %v266 = vld [vmem:[%s264] sm:$0xff]
                  %267 = vst [vmem:[%s265] sm:$0xff] %v266
                  %v268 = vld [vmem:[%s264 + $0x8] sm:$0xff]
                  %269 = vst [vmem:[%s265 + $0x8] sm:$0xff] %v268
                  %v270 = vld [vmem:[%s264 + $0x10] sm:$0xff]
                  %271 = vst [vmem:[%s265 + $0x10] sm:$0xff] %v270
                  %v272 = vld [vmem:[%s264 + $0x18] sm:$0xff]
                  %273 = vst [vmem:[%s265 + $0x18] sm:$0xff] %v272
                  %v274 = vld [vmem:[%s264 + $0x20] sm:$0xff]
                  %275 = vst [vmem:[%s265 + $0x20] sm:$0xff] %v274
                  %v276 = vld [vmem:[%s264 + $0x28] sm:$0xff]
                  %277 = vst [vmem:[%s265 + $0x28] sm:$0xff] %v276
                  %v278 = vld [vmem:[%s264 + $0x30] sm:$0xff]
                  %279 = vst [vmem:[%s265 + $0x30] sm:$0xff] %v278
                  %v280 = vld [vmem:[%s264 + $0x38] sm:$0xff]
                  %281 = vst [vmem:[%s265 + $0x38] sm:$0xff] %v280
                  %v282 = vld [vmem:[%s264 + $0x40] sm:$0xff]
                  %283 = vst [vmem:[%s265 + $0x40] sm:$0xff] %v282
                  %v284 = vld [vmem:[%s264 + $0x48] sm:$0xff]
                  %285 = vst [vmem:[%s265 + $0x48] sm:$0xff] %v284
                  %v286 = vld [vmem:[%s264 + $0x50] sm:$0xff]
                  %287 = vst [vmem:[%s265 + $0x50] sm:$0xff] %v286
                  %v288 = vld [vmem:[%s264 + $0x58] sm:$0xff]
                  %289 = vst [vmem:[%s265 + $0x58] sm:$0xff] %v288
                  %v290 = vld [vmem:[%s264 + $0x60] sm:$0xff]
                  %291 = vst [vmem:[%s265 + $0x60] sm:$0xff] %v290
                  %v292 = vld [vmem:[%s264 + $0x68] sm:$0xff]
                  %293 = vst [vmem:[%s265 + $0x68] sm:$0xff] %v292
                  %v294 = vld [vmem:[%s264 + $0x70] sm:$0xff]
                  %295 = vst [vmem:[%s265 + $0x70] sm:$0xff] %v294
                  %v296 = vld [vmem:[%s264 + $0x78] sm:$0xff]
                  %297 = vst [vmem:[%s265 + $0x78] sm:$0xff] %v296
                  %v298 = vld [vmem:[%s264 + $0x180] sm:$0xff]
                  %299 = vst [vmem:[%s265 + $0x80] sm:$0xff] %v298
                  %v300 = vld [vmem:[%s264 + $0x188] sm:$0xff]
                  %301 = vst [vmem:[%s265 + $0x88] sm:$0xff] %v300
                  %v302 = vld [vmem:[%s264 + $0x190] sm:$0xff]
                  %303 = vst [vmem:[%s265 + $0x90] sm:$0xff] %v302
                  %v304 = vld [vmem:[%s264 + $0x198] sm:$0xff]
                  %305 = vst [vmem:[%s265 + $0x98] sm:$0xff] %v304
                  %v306 = vld [vmem:[%s264 + $0x1a0] sm:$0xff]
                  %307 = vst [vmem:[%s265 + $0xa0] sm:$0xff] %v306
                  %v308 = vld [vmem:[%s264 + $0x1a8] sm:$0xff]
                  %309 = vst [vmem:[%s265 + $0xa8] sm:$0xff] %v308
                  %v310 = vld [vmem:[%s264 + $0x1b0] sm:$0xff]
                  %311 = vst [vmem:[%s265 + $0xb0] sm:$0xff] %v310
                  %v312 = vld [vmem:[%s264 + $0x1b8] sm:$0xff]
                  %313 = vst [vmem:[%s265 + $0xb8] sm:$0xff] %v312
                  %v314 = vld [vmem:[%s264 + $0x1c0] sm:$0xff]
                  %315 = vst [vmem:[%s265 + $0xc0] sm:$0xff] %v314
                  %v316 = vld [vmem:[%s264 + $0x1c8] sm:$0xff]
                  %317 = vst [vmem:[%s265 + $0xc8] sm:$0xff] %v316
                  %v318 = vld [vmem:[%s264 + $0x1d0] sm:$0xff]
                  %319 = vst [vmem:[%s265 + $0xd0] sm:$0xff] %v318
                  %v320 = vld [vmem:[%s264 + $0x1d8] sm:$0xff]
                  %321 = vst [vmem:[%s265 + $0xd8] sm:$0xff] %v320
                  %v322 = vld [vmem:[%s264 + $0x1e0] sm:$0xff]
                  %323 = vst [vmem:[%s265 + $0xe0] sm:$0xff] %v322
                  %v324 = vld [vmem:[%s264 + $0x1e8] sm:$0xff]
                  %325 = vst [vmem:[%s265 + $0xe8] sm:$0xff] %v324
                  %v326 = vld [vmem:[%s264 + $0x1f0] sm:$0xff]
                  %327 = vst [vmem:[%s265 + $0xf0] sm:$0xff] %v326
                  %v328 = vld [vmem:[%s264 + $0x1f8] sm:$0xff]
                  %329 = vst [vmem:[%s265 + $0xf8] sm:$0xff] %v328
                  %v330 = vld [vmem:[%s264 + $0x300] sm:$0xff]
                  %331 = vst [vmem:[%s265 + $0x100] sm:$0xff] %v330
                  %v332 = vld [vmem:[%s264 + $0x308] sm:$0xff]
                  %333 = vst [vmem:[%s265 + $0x108] sm:$0xff] %v332
                  %v334 = vld [vmem:[%s264 + $0x310] sm:$0xff]
                  %335 = vst [vmem:[%s265 + $0x110] sm:$0xff] %v334
                  %v336 = vld [vmem:[%s264 + $0x318] sm:$0xff]
                  %337 = vst [vmem:[%s265 + $0x118] sm:$0xff] %v336
                  %v338 = vld [vmem:[%s264 + $0x320] sm:$0xff]
                  %339 = vst [vmem:[%s265 + $0x120] sm:$0xff] %v338
                  %v340 = vld [vmem:[%s264 + $0x328] sm:$0xff]
                  %341 = vst [vmem:[%s265 + $0x128] sm:$0xff] %v340
                  %v342 = vld [vmem:[%s264 + $0x330] sm:$0xff]
                  %343 = vst [vmem:[%s265 + $0x130] sm:$0xff] %v342
                  %v344 = vld [vmem:[%s264 + $0x338] sm:$0xff]
                  %345 = vst [vmem:[%s265 + $0x138] sm:$0xff] %v344
                  %v346 = vld [vmem:[%s264 + $0x340] sm:$0xff]
                  %347 = vst [vmem:[%s265 + $0x140] sm:$0xff] %v346
                  %v348 = vld [vmem:[%s264 + $0x348] sm:$0xff]
                  %349 = vst [vmem:[%s265 + $0x148] sm:$0xff] %v348
                  %v350 = vld [vmem:[%s264 + $0x350] sm:$0xff]
                  %351 = vst [vmem:[%s265 + $0x150] sm:$0xff] %v350
                  %v352 = vld [vmem:[%s264 + $0x358] sm:$0xff]
                  %353 = vst [vmem:[%s265 + $0x158] sm:$0xff] %v352
                  %v354 = vld [vmem:[%s264 + $0x360] sm:$0xff]
                  %355 = vst [vmem:[%s265 + $0x160] sm:$0xff] %v354
                  %v356 = vld [vmem:[%s264 + $0x368] sm:$0xff]
                  %357 = vst [vmem:[%s265 + $0x168] sm:$0xff] %v356
                  %v358 = vld [vmem:[%s264 + $0x370] sm:$0xff]
                  %359 = vst [vmem:[%s265 + $0x170] sm:$0xff] %v358
                  %v360 = vld [vmem:[%s264 + $0x378] sm:$0xff]
                  %361 = vst [vmem:[%s265 + $0x178] sm:$0xff] %v360
                  %v362 = vld [vmem:[%s264 + $0x480] sm:$0xff]
                  %363 = vst [vmem:[%s265 + $0x180] sm:$0xff] %v362
                  %v364 = vld [vmem:[%s264 + $0x488] sm:$0xff]
                  %365 = vst [vmem:[%s265 + $0x188] sm:$0xff] %v364
                  %v366 = vld [vmem:[%s264 + $0x490] sm:$0xff]
                  %367 = vst [vmem:[%s265 + $0x190] sm:$0xff] %v366
                  %v368 = vld [vmem:[%s264 + $0x498] sm:$0xff]
                  %369 = vst [vmem:[%s265 + $0x198] sm:$0xff] %v368
                  %v370 = vld [vmem:[%s264 + $0x4a0] sm:$0xff]
                  %371 = vst [vmem:[%s265 + $0x1a0] sm:$0xff] %v370
                  %v372 = vld [vmem:[%s264 + $0x4a8] sm:$0xff]
                  %373 = vst [vmem:[%s265 + $0x1a8] sm:$0xff] %v372
                  %v374 = vld [vmem:[%s264 + $0x4b0] sm:$0xff]
                  %375 = vst [vmem:[%s265 + $0x1b0] sm:$0xff] %v374
                  %v376 = vld [vmem:[%s264 + $0x4b8] sm:$0xff]
                  %377 = vst [vmem:[%s265 + $0x1b8] sm:$0xff] %v376
                  %v378 = vld [vmem:[%s264 + $0x4c0] sm:$0xff]
                  %379 = vst [vmem:[%s265 + $0x1c0] sm:$0xff] %v378
                  %v380 = vld [vmem:[%s264 + $0x4c8] sm:$0xff]
                  %381 = vst [vmem:[%s265 + $0x1c8] sm:$0xff] %v380
                  %v382 = vld [vmem:[%s264 + $0x4d0] sm:$0xff]
                  %383 = vst [vmem:[%s265 + $0x1d0] sm:$0xff] %v382
                  %v384 = vld [vmem:[%s264 + $0x4d8] sm:$0xff]
                  %385 = vst [vmem:[%s265 + $0x1d8] sm:$0xff] %v384
                  %v386 = vld [vmem:[%s264 + $0x4e0] sm:$0xff]
                  %387 = vst [vmem:[%s265 + $0x1e0] sm:$0xff] %v386
                  %v388 = vld [vmem:[%s264 + $0x4e8] sm:$0xff]
                  %389 = vst [vmem:[%s265 + $0x1e8] sm:$0xff] %v388
                  %v390 = vld [vmem:[%s264 + $0x4f0] sm:$0xff]
                  %391 = vst [vmem:[%s265 + $0x1f0] sm:$0xff] %v390
                  %v392 = vld [vmem:[%s264 + $0x4f8] sm:$0xff]
                  %393 = vst [vmem:[%s265 + $0x1f8] sm:$0xff] %v392
                $region52: #{semantic_attention.3} parent=46 // loop_footer
                  %s263 = sadd.s32 1, %s259
                $region53: #{semantic_attention.3} parent=46 // loop_footer_branch
                  %258 = sbr.rel target = $region49
                $region54: #{semantic_attention.3} parent=46 // loop_exit
                  _
              $region47: #{semantic_attention.3} parent=31 // pred_fallthru
                _
              // Predicated region
              $region55: #{semantic_attention.3} parent=31 // pred_check
                _
              $region56: #{semantic_attention.3} parent=31 // pred_check_branch
                %395 = sbr.rel target = $region58
              $region57: #{semantic_attention.3} parent=31 // pred_region
                _
              $region58: #{semantic_attention.3} parent=31 // pred_fallthru
                _
            $region32: #{semantic_attention.3} parent=27 // pred_fallthru
              _
            // Predicated region
            $region33: #{semantic_attention.3} parent=27 // pred_check
              _
            $region34: #{semantic_attention.3} parent=27 // pred_check_branch
              %118 = sbr.rel target = $region36
            $region35: #{semantic_attention.3} parent=27 // pred_region
              loop: start=0, step=1, limit=1
              $region37: #{semantic_attention.3} parent=35 // loop_pre_header
                _
              $region38: #{semantic_attention.3} parent=35 // loop_header
                %s121 = sphi 0, %s125
                %p122 = scmp.ge.s32.totalorder %s121, 1
                %s126 = sphi %s112, %s112
                %s127 = sphi %s109, %s109
              $region39: #{semantic_attention.3} parent=35 // loop_header_branch
                %124 = sbr.rel (%p122) target = $region43
              $region40: #{semantic_attention.3} parent=35 // loop_body
                %v128 = vld [vmem:[%s126] sm:$0xff]
                %129 = vst [vmem:[%s127] sm:$0xff] %v128
                %v130 = vld [vmem:[%s126 + $0x8] sm:$0xff]
                %131 = vst [vmem:[%s127 + $0x8] sm:$0xff] %v130
                %v132 = vld [vmem:[%s126 + $0x10] sm:$0xff]
                %133 = vst [vmem:[%s127 + $0x10] sm:$0xff] %v132
                %v134 = vld [vmem:[%s126 + $0x18] sm:$0xff]
                %135 = vst [vmem:[%s127 + $0x18] sm:$0xff] %v134
                %v136 = vld [vmem:[%s126 + $0x20] sm:$0xff]
                %137 = vst [vmem:[%s127 + $0x20] sm:$0xff] %v136
                %v138 = vld [vmem:[%s126 + $0x28] sm:$0xff]
                %139 = vst [vmem:[%s127 + $0x28] sm:$0xff] %v138
                %v140 = vld [vmem:[%s126 + $0x30] sm:$0xff]
                %141 = vst [vmem:[%s127 + $0x30] sm:$0xff] %v140
                %v142 = vld [vmem:[%s126 + $0x38] sm:$0xff]
                %143 = vst [vmem:[%s127 + $0x38] sm:$0xff] %v142
                %v144 = vld [vmem:[%s126 + $0x40] sm:$0xff]
                %145 = vst [vmem:[%s127 + $0x40] sm:$0xff] %v144
                %v146 = vld [vmem:[%s126 + $0x48] sm:$0xff]
                %147 = vst [vmem:[%s127 + $0x48] sm:$0xff] %v146
                %v148 = vld [vmem:[%s126 + $0x50] sm:$0xff]
                %149 = vst [vmem:[%s127 + $0x50] sm:$0xff] %v148
                %v150 = vld [vmem:[%s126 + $0x58] sm:$0xff]
                %151 = vst [vmem:[%s127 + $0x58] sm:$0xff] %v150
                %v152 = vld [vmem:[%s126 + $0x60] sm:$0xff]
                %153 = vst [vmem:[%s127 + $0x60] sm:$0xff] %v152
                %v154 = vld [vmem:[%s126 + $0x68] sm:$0xff]
                %155 = vst [vmem:[%s127 + $0x68] sm:$0xff] %v154
                %v156 = vld [vmem:[%s126 + $0x70] sm:$0xff]
                %157 = vst [vmem:[%s127 + $0x70] sm:$0xff] %v156
                %v158 = vld [vmem:[%s126 + $0x78] sm:$0xff]
                %159 = vst [vmem:[%s127 + $0x78] sm:$0xff] %v158
                %v160 = vld [vmem:[%s126 + $0x180] sm:$0xff]
                %161 = vst [vmem:[%s127 + $0x80] sm:$0xff] %v160
                %v162 = vld [vmem:[%s126 + $0x188] sm:$0xff]
                %163 = vst [vmem:[%s127 + $0x88] sm:$0xff] %v162
                %v164 = vld [vmem:[%s126 + $0x190] sm:$0xff]
                %165 = vst [vmem:[%s127 + $0x90] sm:$0xff] %v164
                %v166 = vld [vmem:[%s126 + $0x198] sm:$0xff]
                %167 = vst [vmem:[%s127 + $0x98] sm:$0xff] %v166
                %v168 = vld [vmem:[%s126 + $0x1a0] sm:$0xff]
                %169 = vst [vmem:[%s127 + $0xa0] sm:$0xff] %v168
                %v170 = vld [vmem:[%s126 + $0x1a8] sm:$0xff]
                %171 = vst [vmem:[%s127 + $0xa8] sm:$0xff] %v170
                %v172 = vld [vmem:[%s126 + $0x1b0] sm:$0xff]
                %173 = vst [vmem:[%s127 + $0xb0] sm:$0xff] %v172
                %v174 = vld [vmem:[%s126 + $0x1b8] sm:$0xff]
                %175 = vst [vmem:[%s127 + $0xb8] sm:$0xff] %v174
                %v176 = vld [vmem:[%s126 + $0x1c0] sm:$0xff]
                %177 = vst [vmem:[%s127 + $0xc0] sm:$0xff] %v176
                %v178 = vld [vmem:[%s126 + $0x1c8] sm:$0xff]
                %179 = vst [vmem:[%s127 + $0xc8] sm:$0xff] %v178
                %v180 = vld [vmem:[%s126 + $0x1d0] sm:$0xff]
                %181 = vst [vmem:[%s127 + $0xd0] sm:$0xff] %v180
                %v182 = vld [vmem:[%s126 + $0x1d8] sm:$0xff]
                %183 = vst [vmem:[%s127 + $0xd8] sm:$0xff] %v182
                %v184 = vld [vmem:[%s126 + $0x1e0] sm:$0xff]
                %185 = vst [vmem:[%s127 + $0xe0] sm:$0xff] %v184
                %v186 = vld [vmem:[%s126 + $0x1e8] sm:$0xff]
                %187 = vst [vmem:[%s127 + $0xe8] sm:$0xff] %v186
                %v188 = vld [vmem:[%s126 + $0x1f0] sm:$0xff]
                %189 = vst [vmem:[%s127 + $0xf0] sm:$0xff] %v188
                %v190 = vld [vmem:[%s126 + $0x1f8] sm:$0xff]
                %191 = vst [vmem:[%s127 + $0xf8] sm:$0xff] %v190
                %v192 = vld [vmem:[%s126 + $0x300] sm:$0xff]
                %193 = vst [vmem:[%s127 + $0x100] sm:$0xff] %v192
                %v194 = vld [vmem:[%s126 + $0x308] sm:$0xff]
                %195 = vst [vmem:[%s127 + $0x108] sm:$0xff] %v194
                %v196 = vld [vmem:[%s126 + $0x310] sm:$0xff]
                %197 = vst [vmem:[%s127 + $0x110] sm:$0xff] %v196
                %v198 = vld [vmem:[%s126 + $0x318] sm:$0xff]
                %199 = vst [vmem:[%s127 + $0x118] sm:$0xff] %v198
                %v200 = vld [vmem:[%s126 + $0x320] sm:$0xff]
                %201 = vst [vmem:[%s127 + $0x120] sm:$0xff] %v200
                %v202 = vld [vmem:[%s126 + $0x328] sm:$0xff]
                %203 = vst [vmem:[%s127 + $0x128] sm:$0xff] %v202
                %v204 = vld [vmem:[%s126 + $0x330] sm:$0xff]
                %205 = vst [vmem:[%s127 + $0x130] sm:$0xff] %v204
                %v206 = vld [vmem:[%s126 + $0x338] sm:$0xff]
                %207 = vst [vmem:[%s127 + $0x138] sm:$0xff] %v206
                %v208 = vld [vmem:[%s126 + $0x340] sm:$0xff]
                %209 = vst [vmem:[%s127 + $0x140] sm:$0xff] %v208
                %v210 = vld [vmem:[%s126 + $0x348] sm:$0xff]
                %211 = vst [vmem:[%s127 + $0x148] sm:$0xff] %v210
                %v212 = vld [vmem:[%s126 + $0x350] sm:$0xff]
                %213 = vst [vmem:[%s127 + $0x150] sm:$0xff] %v212
                %v214 = vld [vmem:[%s126 + $0x358] sm:$0xff]
                %215 = vst [vmem:[%s127 + $0x158] sm:$0xff] %v214
                %v216 = vld [vmem:[%s126 + $0x360] sm:$0xff]
                %217 = vst [vmem:[%s127 + $0x160] sm:$0xff] %v216
                %v218 = vld [vmem:[%s126 + $0x368] sm:$0xff]
                %219 = vst [vmem:[%s127 + $0x168] sm:$0xff] %v218
                %v220 = vld [vmem:[%s126 + $0x370] sm:$0xff]
                %221 = vst [vmem:[%s127 + $0x170] sm:$0xff] %v220
                %v222 = vld [vmem:[%s126 + $0x378] sm:$0xff]
                %223 = vst [vmem:[%s127 + $0x178] sm:$0xff] %v222
                %v224 = vld [vmem:[%s126 + $0x480] sm:$0xff]
                %225 = vst [vmem:[%s127 + $0x180] sm:$0xff] %v224
                %v226 = vld [vmem:[%s126 + $0x488] sm:$0xff]
                %227 = vst [vmem:[%s127 + $0x188] sm:$0xff] %v226
                %v228 = vld [vmem:[%s126 + $0x490] sm:$0xff]
                %229 = vst [vmem:[%s127 + $0x190] sm:$0xff] %v228
                %v230 = vld [vmem:[%s126 + $0x498] sm:$0xff]
                %231 = vst [vmem:[%s127 + $0x198] sm:$0xff] %v230
                %v232 = vld [vmem:[%s126 + $0x4a0] sm:$0xff]
                %233 = vst [vmem:[%s127 + $0x1a0] sm:$0xff] %v232
                %v234 = vld [vmem:[%s126 + $0x4a8] sm:$0xff]
                %235 = vst [vmem:[%s127 + $0x1a8] sm:$0xff] %v234
                %v236 = vld [vmem:[%s126 + $0x4b0] sm:$0xff]
                %237 = vst [vmem:[%s127 + $0x1b0] sm:$0xff] %v236
                %v238 = vld [vmem:[%s126 + $0x4b8] sm:$0xff]
                %239 = vst [vmem:[%s127 + $0x1b8] sm:$0xff] %v238
                %v240 = vld [vmem:[%s126 + $0x4c0] sm:$0xff]
                %241 = vst [vmem:[%s127 + $0x1c0] sm:$0xff] %v240
                %v242 = vld [vmem:[%s126 + $0x4c8] sm:$0xff]
                %243 = vst [vmem:[%s127 + $0x1c8] sm:$0xff] %v242
                %v244 = vld [vmem:[%s126 + $0x4d0] sm:$0xff]
                %245 = vst [vmem:[%s127 + $0x1d0] sm:$0xff] %v244
                %v246 = vld [vmem:[%s126 + $0x4d8] sm:$0xff]
                %247 = vst [vmem:[%s127 + $0x1d8] sm:$0xff] %v246
                %v248 = vld [vmem:[%s126 + $0x4e0] sm:$0xff]
                %249 = vst [vmem:[%s127 + $0x1e0] sm:$0xff] %v248
                %v250 = vld [vmem:[%s126 + $0x4e8] sm:$0xff]
                %251 = vst [vmem:[%s127 + $0x1e8] sm:$0xff] %v250
                %v252 = vld [vmem:[%s126 + $0x4f0] sm:$0xff]
                %253 = vst [vmem:[%s127 + $0x1f0] sm:$0xff] %v252
                %v254 = vld [vmem:[%s126 + $0x4f8] sm:$0xff]
                %255 = vst [vmem:[%s127 + $0x1f8] sm:$0xff] %v254
              $region41: #{semantic_attention.3} parent=35 // loop_footer
                %s125 = sadd.s32 1, %s121
              $region42: #{semantic_attention.3} parent=35 // loop_footer_branch
                %120 = sbr.rel target = $region38
              $region43: #{semantic_attention.3} parent=35 // loop_exit
                _
            $region36: #{semantic_attention.3} parent=27 // pred_fallthru
              _
          $region28: #{semantic_attention.3} parent=23 // pred_fallthru
            _
          %396 = vnop
        $region24: #{semantic_attention.3} parent=19 // pred_fallthru
          _
      $region20: #{semantic_attention.3} parent=5 // pred_fallthru
        _
      %p397 = scmp.le.s32.totalorder 1, %s8
      %p398 = scmp.lt.s32.totalorder %s8, 4
      %p399 = pnand %p397, %p398
      %p400 = pneg %p399
      // Predicated region
      $region59: #{semantic_attention.3} parent=5 // pred_check
        _
      $region60: #{semantic_attention.3} parent=5 // pred_check_branch
        %402 = sbr.rel (%p399) target = $region62
      $region61: #{semantic_attention.3} parent=5 // pred_region
        %s403 = ssub.s32 %s8, 1
        %s404 = sand.u32 %s21, 1
        %s405 = sand.u32 %s21, 1
        %s406 = smul.addr %s405, 512
        %s407 = scalar_lea.vmem [#allocation2], %s406
        // Predicated region
        $region63: #{semantic_attention.3} parent=61 // pred_check
          %p408 = pneg %p34
        $region64: #{semantic_attention.3} parent=61 // pred_check_branch
          %410 = sbr.rel (%p408) target = $region66
        $region65: #{semantic_attention.3} parent=61 // pred_region
          _
        $region66: #{semantic_attention.3} parent=61 // pred_fallthru
          _
        %s411 = sand.u32 %s21, 1
        %s412 = sand.u32 %s21, 1
        %s413 = smul.addr %s412, 512
        %s414 = scalar_lea.vmem [#allocation2], %s413
        %p415 = pneg %p34
        %p416 = pneg %p31
        %p417 = pneg %p55
        %p418 = pneg %p52
        %p419 = pneg %p81
        %p420 = pneg %p78
        %s421 = smul.u32 16, %s13
        %p422 = scmp.lt.s32.totalorder %s421, 47
        %s423 = scalar_select %p422, %s421, 47
        %s424 = smul.addr %s423, 8
        %s425 = scalar_lea.vmem %s2, %s424
        %s426 = smul.u32 16, %s13
        %s427 = smul.u32 16, %s13
        %p428 = scmp.lt.s32.totalorder %s427, 47
        %s429 = scalar_select %p428, %s427, 47
        %s430 = smul.addr %s429, 8
        %s431 = scalar_lea.vmem %s2, %s430
        %s432 = smul.u32 16, %s13
        %v433 = vld [vmem:[%s407] sm:$0xff]
        %v434 = vld [vmem:[%s407 + $0x8] sm:$0xff]
        %v435 = vld [vmem:[%s407 + $0x10] sm:$0xff]
        %v436 = vld [vmem:[%s407 + $0x18] sm:$0xff]
        %v437 = vld [vmem:[%s407 + $0x20] sm:$0xff]
        %v438 = vld [vmem:[%s407 + $0x28] sm:$0xff]
        %v439 = vld [vmem:[%s407 + $0x30] sm:$0xff]
        %v440 = vld [vmem:[%s407 + $0x38] sm:$0xff]
        %v441 = vld [vmem:[%s407 + $0x40] sm:$0xff]
        %v442 = vld [vmem:[%s407 + $0x48] sm:$0xff]
        %v443 = vld [vmem:[%s407 + $0x50] sm:$0xff]
        %v444 = vld [vmem:[%s407 + $0x58] sm:$0xff]
        %v445 = vld [vmem:[%s407 + $0x60] sm:$0xff]
        %v446 = vld [vmem:[%s407 + $0x68] sm:$0xff]
        %v447 = vld [vmem:[%s407 + $0x70] sm:$0xff]
        %v448 = vld [vmem:[%s407 + $0x78] sm:$0xff]
        %v449 = vld [vmem:[%s407 + $0x80] sm:$0xff]
        %v450 = vld [vmem:[%s407 + $0x88] sm:$0xff]
        %v451 = vld [vmem:[%s407 + $0x90] sm:$0xff]
        %v452 = vld [vmem:[%s407 + $0x98] sm:$0xff]
        %v453 = vld [vmem:[%s407 + $0xa0] sm:$0xff]
        %v454 = vld [vmem:[%s407 + $0xa8] sm:$0xff]
        %v455 = vld [vmem:[%s407 + $0xb0] sm:$0xff]
        %v456 = vld [vmem:[%s407 + $0xb8] sm:$0xff]
        %v457 = vld [vmem:[%s407 + $0xc0] sm:$0xff]
        %v458 = vld [vmem:[%s407 + $0xc8] sm:$0xff]
        %v459 = vld [vmem:[%s407 + $0xd0] sm:$0xff]
        %v460 = vld [vmem:[%s407 + $0xd8] sm:$0xff]
        %v461 = vld [vmem:[%s407 + $0xe0] sm:$0xff]
        %v462 = vld [vmem:[%s407 + $0xe8] sm:$0xff]
        %v463 = vld [vmem:[%s407 + $0xf0] sm:$0xff]
        %v464 = vld [vmem:[%s407 + $0xf8] sm:$0xff]
        %v465 = vld [vmem:[%s407 + $0x100] sm:$0xff]
        %v466 = vld [vmem:[%s407 + $0x108] sm:$0xff]
        %v467 = vld [vmem:[%s407 + $0x110] sm:$0xff]
        %v468 = vld [vmem:[%s407 + $0x118] sm:$0xff]
        %v469 = vld [vmem:[%s407 + $0x120] sm:$0xff]
        %v470 = vld [vmem:[%s407 + $0x128] sm:$0xff]
        %v471 = vld [vmem:[%s407 + $0x130] sm:$0xff]
        %v472 = vld [vmem:[%s407 + $0x138] sm:$0xff]
        %v473 = vld [vmem:[%s407 + $0x140] sm:$0xff]
        %v474 = vld [vmem:[%s407 + $0x148] sm:$0xff]
        %v475 = vld [vmem:[%s407 + $0x150] sm:$0xff]
        %v476 = vld [vmem:[%s407 + $0x158] sm:$0xff]
        %v477 = vld [vmem:[%s407 + $0x160] sm:$0xff]
        %v478 = vld [vmem:[%s407 + $0x168] sm:$0xff]
        %v479 = vld [vmem:[%s407 + $0x170] sm:$0xff]
        %v480 = vld [vmem:[%s407 + $0x178] sm:$0xff]
        %v481 = vld [vmem:[%s407 + $0x180] sm:$0xff]
        %v482 = vld [vmem:[%s407 + $0x188] sm:$0xff]
        %v483 = vld [vmem:[%s407 + $0x190] sm:$0xff]
        %v484 = vld [vmem:[%s407 + $0x198] sm:$0xff]
        %v485 = vld [vmem:[%s407 + $0x1a0] sm:$0xff]
        %v486 = vld [vmem:[%s407 + $0x1a8] sm:$0xff]
        %v487 = vld [vmem:[%s407 + $0x1b0] sm:$0xff]
        %v488 = vld [vmem:[%s407 + $0x1b8] sm:$0xff]
        %v489 = vld [vmem:[%s407 + $0x1c0] sm:$0xff]
        %v490 = vld [vmem:[%s407 + $0x1c8] sm:$0xff]
        %v491 = vld [vmem:[%s407 + $0x1d0] sm:$0xff]
        %v492 = vld [vmem:[%s407 + $0x1d8] sm:$0xff]
        %v493 = vld [vmem:[%s407 + $0x1e0] sm:$0xff]
        %v494 = vld [vmem:[%s407 + $0x1e8] sm:$0xff]
        %v495 = vld [vmem:[%s407 + $0x1f0] sm:$0xff]
        %v496 = vld [vmem:[%s407 + $0x1f8] sm:$0xff]
        %v497 = vld [vmem:[%s1] sm:$0x1]
        %v498 = vld [vmem:[%s1 + $0x1] sm:$0x1]
        %v499 = vld [vmem:[%s1 + $0x2] sm:$0x1]
        %v500 = vld [vmem:[%s1 + $0x3] sm:$0x1]
        %v505 = vlaneseq
        %v506 = vshrl.u32 %v505, 7
        %v507 = vsub.s32 0, %v506
        %v508 = vrot.slane %v497, %v507
        %v509 = vlaneseq
        %v510 = vshrl.u32 %v509, 7
        %v511 = vsub.s32 0, %v510
        %v512 = vrot.slane %v498, %v511
        %v513 = vlaneseq
        %v514 = vshrl.u32 %v513, 7
        %v515 = vsub.s32 0, %v514
        %v516 = vrot.slane %v499, %v515
        %v517 = vlaneseq
        %v518 = vshrl.u32 %v517, 7
        %v519 = vsub.s32 0, %v518
        %v520 = vrot.slane %v500, %v519
        %521 = vset.pattern.permute.xlu0 0
        %522 = vperm.xlu0 %521, %v508
        %v523 = vpop.permute.xlu0 %522
        %525 = vset.pattern.permute.xlu0 0
        %526 = vperm.xlu0 %525, %v512
        %v527 = vpop.permute.xlu0 %526
        %529 = vset.pattern.permute.xlu0 0
        %530 = vperm.xlu0 %529, %v516
        %v531 = vpop.permute.xlu0 %530
        %533 = vset.pattern.permute.xlu0 0
        %534 = vperm.xlu0 %533, %v520
        %v535 = vpop.permute.xlu0 %534
        %v537 = vmul.f32 %v433, %v523
        %v538 = vmul.f32 %v434, %v523
        %v539 = vmul.f32 %v435, %v523
        %v540 = vmul.f32 %v436, %v523
        %v541 = vmul.f32 %v437, %v523
        %v542 = vmul.f32 %v438, %v523
        %v543 = vmul.f32 %v439, %v523
        %v544 = vmul.f32 %v440, %v523
        %v545 = vmul.f32 %v441, %v523
        %v546 = vmul.f32 %v442, %v523
        %v547 = vmul.f32 %v443, %v523
        %v548 = vmul.f32 %v444, %v523
        %v549 = vmul.f32 %v445, %v523
        %v550 = vmul.f32 %v446, %v523
        %v551 = vmul.f32 %v447, %v523
        %v552 = vmul.f32 %v448, %v523
        %v553 = vmul.f32 %v449, %v527
        %v554 = vmul.f32 %v450, %v527
        %v555 = vmul.f32 %v451, %v527
        %v556 = vmul.f32 %v452, %v527
        %v557 = vmul.f32 %v453, %v527
        %v558 = vmul.f32 %v454, %v527
        %v559 = vmul.f32 %v455, %v527
        %v560 = vmul.f32 %v456, %v527
        %v561 = vmul.f32 %v457, %v527
        %v562 = vmul.f32 %v458, %v527
        %v563 = vmul.f32 %v459, %v527
        %v564 = vmul.f32 %v460, %v527
        %v565 = vmul.f32 %v461, %v527
        %v566 = vmul.f32 %v462, %v527
        %v567 = vmul.f32 %v463, %v527
        %v568 = vmul.f32 %v464, %v527
        %v569 = vmul.f32 %v465, %v531
        %v570 = vmul.f32 %v466, %v531
        %v571 = vmul.f32 %v467, %v531
        %v572 = vmul.f32 %v468, %v531
        %v573 = vmul.f32 %v469, %v531
        %v574 = vmul.f32 %v470, %v531
        %v575 = vmul.f32 %v471, %v531
        %v576 = vmul.f32 %v472, %v531
        %v577 = vmul.f32 %v473, %v531
        %v578 = vmul.f32 %v474, %v531
        %v579 = vmul.f32 %v475, %v531
        %v580 = vmul.f32 %v476, %v531
        %v581 = vmul.f32 %v477, %v531
        %v582 = vmul.f32 %v478, %v531
        %v583 = vmul.f32 %v479, %v531
        %v584 = vmul.f32 %v480, %v531
        %v585 = vmul.f32 %v481, %v535
        %v586 = vmul.f32 %v482, %v535
        %v587 = vmul.f32 %v483, %v535
        %v588 = vmul.f32 %v484, %v535
        %v589 = vmul.f32 %v485, %v535
        %v590 = vmul.f32 %v486, %v535
        %v591 = vmul.f32 %v487, %v535
        %v592 = vmul.f32 %v488, %v535
        %v593 = vmul.f32 %v489, %v535
        %v594 = vmul.f32 %v490, %v535
        %v595 = vmul.f32 %v491, %v535
        %v596 = vmul.f32 %v492, %v535
        %v597 = vmul.f32 %v493, %v535
        %v598 = vmul.f32 %v494, %v535
        %v599 = vmul.f32 %v495, %v535
        %v600 = vmul.f32 %v496, %v535
        %v601 = vadd.f32 %v537, %v553
        %v602 = vadd.f32 %v601, %v569
        %v603 = vadd.f32 %v602, %v585
        %v604 = vadd.f32 %v538, %v554
        %v605 = vadd.f32 %v604, %v570
        %v606 = vadd.f32 %v605, %v586
        %v607 = vadd.f32 %v539, %v555
        %v608 = vadd.f32 %v607, %v571
        %v609 = vadd.f32 %v608, %v587
        %v610 = vadd.f32 %v540, %v556
        %v611 = vadd.f32 %v610, %v572
        %v612 = vadd.f32 %v611, %v588
        %v613 = vadd.f32 %v541, %v557
        %v614 = vadd.f32 %v613, %v573
        %v615 = vadd.f32 %v614, %v589
        %v616 = vadd.f32 %v542, %v558
        %v617 = vadd.f32 %v616, %v574
        %v618 = vadd.f32 %v617, %v590
        %v619 = vadd.f32 %v543, %v559
        %v620 = vadd.f32 %v619, %v575
        %v621 = vadd.f32 %v620, %v591
        %v622 = vadd.f32 %v544, %v560
        %v623 = vadd.f32 %v622, %v576
        %v624 = vadd.f32 %v623, %v592
        %v625 = vadd.f32 %v545, %v561
        %v626 = vadd.f32 %v625, %v577
        %v627 = vadd.f32 %v626, %v593
        %v628 = vadd.f32 %v546, %v562
        %v629 = vadd.f32 %v628, %v578
        %v630 = vadd.f32 %v629, %v594
        %v631 = vadd.f32 %v547, %v563
        %v632 = vadd.f32 %v631, %v579
        %v633 = vadd.f32 %v632, %v595
        %v634 = vadd.f32 %v548, %v564
        %v635 = vadd.f32 %v634, %v580
        %v636 = vadd.f32 %v635, %v596
        %v637 = vadd.f32 %v549, %v565
        %v638 = vadd.f32 %v637, %v581
        %v639 = vadd.f32 %v638, %v597
        %v640 = vadd.f32 %v550, %v566
        %v641 = vadd.f32 %v640, %v582
        %v642 = vadd.f32 %v641, %v598
        %v643 = vadd.f32 %v551, %v567
        %v644 = vadd.f32 %v643, %v583
        %v645 = vadd.f32 %v644, %v599
        %v646 = vadd.f32 %v552, %v568
        %v647 = vadd.f32 %v646, %v584
        %v648 = vadd.f32 %v647, %v600
        %649 = vst [vmem:[%s431] sm:$0xff] %v603
        %650 = vst [vmem:[%s431 + $0x8] sm:$0xff] %v606
        %651 = vst [vmem:[%s431 + $0x10] sm:$0xff] %v609
        %652 = vst [vmem:[%s431 + $0x18] sm:$0xff] %v612
        %653 = vst [vmem:[%s431 + $0x20] sm:$0xff] %v615
        %654 = vst [vmem:[%s431 + $0x28] sm:$0xff] %v618
        %655 = vst [vmem:[%s431 + $0x30] sm:$0xff] %v621
        %656 = vst [vmem:[%s431 + $0x38] sm:$0xff] %v624
        %657 = vst [vmem:[%s431 + $0x40] sm:$0xff] %v627
        %658 = vst [vmem:[%s431 + $0x48] sm:$0xff] %v630
        %659 = vst [vmem:[%s431 + $0x50] sm:$0xff] %v633
        %660 = vst [vmem:[%s431 + $0x58] sm:$0xff] %v636
        %661 = vst [vmem:[%s431 + $0x60] sm:$0xff] %v639
        %662 = vst [vmem:[%s431 + $0x68] sm:$0xff] %v642
        %663 = vst [vmem:[%s431 + $0x70] sm:$0xff] %v645
        %664 = vst [vmem:[%s431 + $0x78] sm:$0xff] %v648
        %s665 = smul.u32 16, %s13
        %p666 = scmp.lt.s32.totalorder %s665, 47
        %s667 = scalar_select %p666, %s665, 47
        %s668 = smul.addr %s667, 8
        %s669 = scalar_lea.vmem %s2, %s668
        // Predicated region
        $region67: #{semantic_attention.3} parent=61 // pred_check
          %p670 = pneg %p78
        $region68: #{semantic_attention.3} parent=61 // pred_check_branch
          %672 = sbr.rel (%p670) target = $region70
        $region69: #{semantic_attention.3} parent=61 // pred_region
          %s673 = smul.u32 16, %s13
        $region70: #{semantic_attention.3} parent=61 // pred_fallthru
          _
      $region62: #{semantic_attention.3} parent=5 // pred_fallthru
        _
      %p674 = scmp.le.s32.totalorder 2, %s8
      // Predicated region
      $region71: #{semantic_attention.3} parent=5 // pred_check
        %p675 = pneg %p674
      $region72: #{semantic_attention.3} parent=5 // pred_check_branch
        %677 = sbr.rel (%p675) target = $region74
      $region73: #{semantic_attention.3} parent=5 // pred_region
        %s678 = ssub.s32 %s8, 2
        // Predicated region
        $region75: #{semantic_attention.3} parent=73 // pred_check
          %p679 = pneg %p84
        $region76: #{semantic_attention.3} parent=73 // pred_check_branch
          %681 = sbr.rel (%p679) target = $region78
        $region77: #{semantic_attention.3} parent=73 // pred_region
          %s682 = smul.u32 16, %s14
          %p683 = scmp.lt.s32.totalorder %s682, 47
          %s684 = scalar_select %p683, %s682, 47
          %s685 = smul.addr %s684, 8
          %s686 = scalar_lea.vmem %s2, %s685
        $region78: #{semantic_attention.3} parent=73 // pred_fallthru
          _
      $region74: #{semantic_attention.3} parent=5 // pred_fallthru
        _
    $region6: #{semantic_attention.3} parent=1 // loop_footer
      %s12 = sadd.s32 1, %s8
    $region7: #{semantic_attention.3} parent=1 // loop_footer_branch
      %7 = sbr.rel target = $region3
    $region8: #{semantic_attention.3} parent=1 // loop_exit
      _

// kernel: semantic_attention.2
$region0: #{semantic_attention.2}
  #allocation0 [shape = 'u32[]', space=smem, size = 0x4, offset = 0x4, fixed_abs, tag = 'smem constant byte address 0x4 - core index']
  #allocation1 [shape = 'u32[144,128]{1,0:T(1,128)}', space=vmem, size = 0x12000, scoped, tag = 'internal scratch']
  %s0 = inlined_call_operand.vmem [shape: f32[4,384,128], index: 0, kind: input, shape index: {}]
  %s1 = inlined_call_operand.vmem [shape: f32[128,128], index: 1, kind: input, shape index: {}]
  %s2 = inlined_call_operand.vmem [shape: f32[1,128], index: 2, kind: input, shape index: {}]
  %s3 = inlined_call_operand.vmem [shape: f32[1,128], index: 3, kind: input, shape index: {}]
  %s4 = inlined_call_operand.vmem [shape: f32[4,1], index: 4, kind: output, shape index: {}]
  %s5 = sld [smem:[#allocation0]]
  $region91: #{semantic_attention.2} parent=0
    _
  %s7 = ssub.s32 1, %s5
  %s8 = scalar_select 0, %s7, %s5
  $region1: #{semantic_attention.2} parent=0
    #allocation2 [shape = 'u8[524288]{0}', space=vmem, size = 0x80000, scoped, tag = 'input window, operand 0']
    loop: start=0, step=1, limit=5
    $region2: #{semantic_attention.2} parent=1 // loop_pre_header
      _
    $region3: #{semantic_attention.2} parent=1 // loop_header
      %s10 = sphi 0, %s14
      %p11 = scmp.ge.s32.totalorder %s10, 5
      %s20 = sphi 0, %s22
      %s23 = sphi 0, %s20
      %s24 = sphi 0, %s23
      %s40 = sphi 0, %s24
      %s44 = sphi 0, %s44
      %s46 = sphi 0, %s44
      %s47 = sphi 0, %s46
      %s61 = sphi 0, %s47
      %s65 = sphi 0, %s65
      %s67 = sphi 0, %s65
      %s68 = sphi 0, %s67
      %s82 = sphi 0, %s68
      %s86 = sphi 0, %s86
      %s88 = sphi 0, %s86
      %s89 = sphi 0, %s88
      %s103 = sphi 0, %s89
      %s107 = sphi 0, %s107
      %s109 = sphi 0, %s107
      %s110 = sphi 0, %s109
      %s124 = sphi 0, %s110
    $region4: #{semantic_attention.2} parent=1 // loop_header_branch
      %13 = sbr.rel (%p11) target = $region8
    $region5: #{semantic_attention.2} parent=1 // loop_body
      %s15 = ssub.s32 %s10, 1
      %s16 = ssub.s32 %s10, 2
      %s17 = sadd.s32 %s10, 1
      %s18 = ssub.s32 %s10, %s17
      %p19 = scmp.eq.s32.totalorder %s18, 0
      %s21 = sadd.s32 %s20, 1
      %s22 = scalar_select %p19, %s20, %s21
      %p25 = pneg %p19
      %p26 = scmp.eq.s32.totalorder %s10, 2
      %p27 = por %p25, %p26
      %p28 = scmp.ne.s32.totalorder %s20, %s23
      %p29 = scmp.eq.s32.totalorder %s10, 0
      %p30 = por %p28, %p29
      %p31 = scmp.ne.s32.totalorder %s20, %s23
      %p32 = scmp.eq.s32.totalorder %s15, 2
      %p33 = por %p31, %p32
      %p34 = scmp.ne.s32.totalorder %s23, %s24
      %p35 = scmp.eq.s32.totalorder %s15, 0
      %p36 = por %p34, %p35
      %p37 = scmp.ne.s32.totalorder %s23, %s24
      %p38 = scmp.eq.s32.totalorder %s16, 2
      %p39 = por %p37, %p38
      %p41 = scmp.ne.s32.totalorder %s24, %s40
      %p42 = scmp.eq.s32.totalorder %s16, 0
      %p43 = por %p41, %p42
      %s45 = sadd.s32 %s44, 1
      %p48 = scmp.eq.s32.totalorder %s10, 2
      %p49 = scmp.ne.s32.totalorder %s44, %s46
      %p50 = scmp.eq.s32.totalorder %s10, 0
      %p51 = por %p49, %p50
      %p52 = scmp.ne.s32.totalorder %s44, %s46
      %p53 = scmp.eq.s32.totalorder %s15, 2
      %p54 = por %p52, %p53
      %p55 = scmp.ne.s32.totalorder %s46, %s47
      %p56 = scmp.eq.s32.totalorder %s15, 0
      %p57 = por %p55, %p56
      %p58 = scmp.ne.s32.totalorder %s46, %s47
      %p59 = scmp.eq.s32.totalorder %s16, 2
      %p60 = por %p58, %p59
      %p62 = scmp.ne.s32.totalorder %s47, %s61
      %p63 = scmp.eq.s32.totalorder %s16, 0
      %p64 = por %p62, %p63
      %s66 = sadd.s32 %s65, 1
      %p69 = scmp.eq.s32.totalorder %s10, 2
      %p70 = scmp.ne.s32.totalorder %s65, %s67
      %p71 = scmp.eq.s32.totalorder %s10, 0
      %p72 = por %p70, %p71
      %p73 = scmp.ne.s32.totalorder %s65, %s67
      %p74 = scmp.eq.s32.totalorder %s15, 2
      %p75 = por %p73, %p74
      %p76 = scmp.ne.s32.totalorder %s67, %s68
      %p77 = scmp.eq.s32.totalorder %s15, 0
      %p78 = por %p76, %p77
      %p79 = scmp.ne.s32.totalorder %s67, %s68
      %p80 = scmp.eq.s32.totalorder %s16, 2
      %p81 = por %p79, %p80
      %p83 = scmp.ne.s32.totalorder %s68, %s82
      %p84 = scmp.eq.s32.totalorder %s16, 0
      %p85 = por %p83, %p84
      %s87 = sadd.s32 %s86, 1
      %p90 = scmp.eq.s32.totalorder %s10, 2
      %p91 = scmp.ne.s32.totalorder %s86, %s88
      %p92 = scmp.eq.s32.totalorder %s10, 0
      %p93 = por %p91, %p92
      %p94 = scmp.ne.s32.totalorder %s86, %s88
      %p95 = scmp.eq.s32.totalorder %s15, 2
      %p96 = por %p94, %p95
      %p97 = scmp.ne.s32.totalorder %s88, %s89
      %p98 = scmp.eq.s32.totalorder %s15, 0
      %p99 = por %p97, %p98
      %p100 = scmp.ne.s32.totalorder %s88, %s89
      %p101 = scmp.eq.s32.totalorder %s16, 2
      %p102 = por %p100, %p101
      %p104 = scmp.ne.s32.totalorder %s89, %s103
      %p105 = scmp.eq.s32.totalorder %s16, 0
      %p106 = por %p104, %p105
      %s108 = sadd.s32 %s107, 1
      %p111 = scmp.eq.s32.totalorder %s10, 2
      %p112 = scmp.ne.s32.totalorder %s107, %s109
      %p113 = scmp.eq.s32.totalorder %s10, 0
      %p114 = por %p112, %p113
      %p115 = scmp.ne.s32.totalorder %s107, %s109
      %p116 = scmp.eq.s32.totalorder %s15, 2
      %p117 = por %p115, %p116
      %p118 = scmp.ne.s32.totalorder %s109, %s110
      %p119 = scmp.eq.s32.totalorder %s15, 0
      %p120 = por %p118, %p119
      %p121 = scmp.ne.s32.totalorder %s109, %s110
      %p122 = scmp.eq.s32.totalorder %s16, 2
      %p123 = por %p121, %p122
      %p125 = scmp.ne.s32.totalorder %s110, %s124
      %p126 = scmp.eq.s32.totalorder %s16, 0
      %p127 = por %p125, %p126
      %p128 = scmp.le.s32.totalorder 1, %s10
      %p129 = scmp.lt.s32.totalorder %s10, 4
      %p130 = pnand %p128, %p129
      %p131 = pneg %p130
      // Predicated region
      $region9: #{semantic_attention.2} parent=5 // pred_check
        _
      $region10: #{semantic_attention.2} parent=5 // pred_check_branch
        %133 = sbr.rel (%p130) target = $region12
      $region11: #{semantic_attention.2} parent=5 // pred_region
        %s134 = ssub.s32 %s10, 1
        // Predicated region
        $region13: #{semantic_attention.2} parent=11 // pred_check
          %p135 = pneg %p57
        $region14: #{semantic_attention.2} parent=11 // pred_check_branch
          %137 = sbr.rel (%p135) target = $region16
        $region15: #{semantic_attention.2} parent=11 // pred_region
          _
        $region16: #{semantic_attention.2} parent=11 // pred_fallthru
          _
        // Predicated region
        $region17: #{semantic_attention.2} parent=11 // pred_check
          %p138 = pneg %p78
        $region18: #{semantic_attention.2} parent=11 // pred_check_branch
          %140 = sbr.rel (%p138) target = $region20
        $region19: #{semantic_attention.2} parent=11 // pred_region
          _
        $region20: #{semantic_attention.2} parent=11 // pred_fallthru
          _
        // Predicated region
        $region21: #{semantic_attention.2} parent=11 // pred_check
          %p141 = pneg %p99
        $region22: #{semantic_attention.2} parent=11 // pred_check_branch
          %143 = sbr.rel (%p141) target = $region24
        $region23: #{semantic_attention.2} parent=11 // pred_region
          _
        $region24: #{semantic_attention.2} parent=11 // pred_fallthru
          _
      $region12: #{semantic_attention.2} parent=5 // pred_fallthru
        _
      %p144 = scmp.lt.s32.totalorder %s10, 3
      // Predicated region
      $region25: #{semantic_attention.2} parent=5 // pred_check
        %p145 = pneg %p144
      $region26: #{semantic_attention.2} parent=5 // pred_check_branch
        %147 = sbr.rel (%p145) target = $region28
      $region27: #{semantic_attention.2} parent=5 // pred_region
        // Predicated region
        $region29: #{semantic_attention.2} parent=27 // pred_check
          %p148 = pneg %p30
        $region30: #{semantic_attention.2} parent=27 // pred_check_branch
          %150 = sbr.rel (%p148) target = $region32
        $region31: #{semantic_attention.2} parent=27 // pred_region
          %s151 = sand.u32 %s20, 1
          %s152 = sand.u32 %s20, 1
          %s153 = smul.addr %s152, 512
          %s154 = scalar_lea.vmem [#allocation2], %s153
          %s155 = smul.u32 16, %s10
          %s156 = smul.addr %s155, 8
          %s157 = scalar_lea.vmem %s0, %s156
          // Predicated region
          $region33: #{semantic_attention.2} parent=31 // pred_check
            _
          $region34: #{semantic_attention.2} parent=31 // pred_check_branch
            %159 = sbr.rel (0) target = $region36
          $region35: #{semantic_attention.2} parent=31 // pred_region
            // Predicated region
            $region37: #{semantic_attention.2} parent=35 // pred_check
              _
            $region38: #{semantic_attention.2} parent=35 // pred_check_branch
              %161 = sbr.rel (0) target = $region40
            $region39: #{semantic_attention.2} parent=35 // pred_region
              // Predicated region
              $region52: #{semantic_attention.2} parent=39 // pred_check
                _
              $region53: #{semantic_attention.2} parent=39 // pred_check_branch
                %302 = sbr.rel (0) target = $region55
              $region54: #{semantic_attention.2} parent=39 // pred_region
                loop: start=0, step=1, limit=1
                $region56: #{semantic_attention.2} parent=54 // loop_pre_header
                  _
                $region57: #{semantic_attention.2} parent=54 // loop_header
                  %s304 = sphi 0, %s308
                  %p305 = scmp.ge.s32.totalorder %s304, 1
                  %s309 = sphi %s157, %s157
                  %s310 = sphi %s154, %s154
                $region58: #{semantic_attention.2} parent=54 // loop_header_branch
                  %307 = sbr.rel (%p305) target = $region62
                $region59: #{semantic_attention.2} parent=54 // loop_body
                  %v311 = vld [vmem:[%s309] sm:$0xff]
                  %312 = vst [vmem:[%s310] sm:$0xff] %v311
                  %v313 = vld [vmem:[%s309 + $0x8] sm:$0xff]
                  %314 = vst [vmem:[%s310 + $0x8] sm:$0xff] %v313
                  %v315 = vld [vmem:[%s309 + $0x10] sm:$0xff]
                  %316 = vst [vmem:[%s310 + $0x10] sm:$0xff] %v315
                  %v317 = vld [vmem:[%s309 + $0x18] sm:$0xff]
                  %318 = vst [vmem:[%s310 + $0x18] sm:$0xff] %v317
                  %v319 = vld [vmem:[%s309 + $0x20] sm:$0xff]
                  %320 = vst [vmem:[%s310 + $0x20] sm:$0xff] %v319
                  %v321 = vld [vmem:[%s309 + $0x28] sm:$0xff]
                  %322 = vst [vmem:[%s310 + $0x28] sm:$0xff] %v321
                  %v323 = vld [vmem:[%s309 + $0x30] sm:$0xff]
                  %324 = vst [vmem:[%s310 + $0x30] sm:$0xff] %v323
                  %v325 = vld [vmem:[%s309 + $0x38] sm:$0xff]
                  %326 = vst [vmem:[%s310 + $0x38] sm:$0xff] %v325
                  %v327 = vld [vmem:[%s309 + $0x40] sm:$0xff]
                  %328 = vst [vmem:[%s310 + $0x40] sm:$0xff] %v327
                  %v329 = vld [vmem:[%s309 + $0x48] sm:$0xff]
                  %330 = vst [vmem:[%s310 + $0x48] sm:$0xff] %v329
                  %v331 = vld [vmem:[%s309 + $0x50] sm:$0xff]
                  %332 = vst [vmem:[%s310 + $0x50] sm:$0xff] %v331
                  %v333 = vld [vmem:[%s309 + $0x58] sm:$0xff]
                  %334 = vst [vmem:[%s310 + $0x58] sm:$0xff] %v333
                  %v335 = vld [vmem:[%s309 + $0x60] sm:$0xff]
                  %336 = vst [vmem:[%s310 + $0x60] sm:$0xff] %v335
                  %v337 = vld [vmem:[%s309 + $0x68] sm:$0xff]
                  %338 = vst [vmem:[%s310 + $0x68] sm:$0xff] %v337
                  %v339 = vld [vmem:[%s309 + $0x70] sm:$0xff]
                  %340 = vst [vmem:[%s310 + $0x70] sm:$0xff] %v339
                  %v341 = vld [vmem:[%s309 + $0x78] sm:$0xff]
                  %342 = vst [vmem:[%s310 + $0x78] sm:$0xff] %v341
                  %v343 = vld [vmem:[%s309 + $0x180] sm:$0xff]
                  %344 = vst [vmem:[%s310 + $0x80] sm:$0xff] %v343
                  %v345 = vld [vmem:[%s309 + $0x188] sm:$0xff]
                  %346 = vst [vmem:[%s310 + $0x88] sm:$0xff] %v345
                  %v347 = vld [vmem:[%s309 + $0x190] sm:$0xff]
                  %348 = vst [vmem:[%s310 + $0x90] sm:$0xff] %v347
                  %v349 = vld [vmem:[%s309 + $0x198] sm:$0xff]
                  %350 = vst [vmem:[%s310 + $0x98] sm:$0xff] %v349
                  %v351 = vld [vmem:[%s309 + $0x1a0] sm:$0xff]
                  %352 = vst [vmem:[%s310 + $0xa0] sm:$0xff] %v351
                  %v353 = vld [vmem:[%s309 + $0x1a8] sm:$0xff]
                  %354 = vst [vmem:[%s310 + $0xa8] sm:$0xff] %v353
                  %v355 = vld [vmem:[%s309 + $0x1b0] sm:$0xff]
                  %356 = vst [vmem:[%s310 + $0xb0] sm:$0xff] %v355
                  %v357 = vld [vmem:[%s309 + $0x1b8] sm:$0xff]
                  %358 = vst [vmem:[%s310 + $0xb8] sm:$0xff] %v357
                  %v359 = vld [vmem:[%s309 + $0x1c0] sm:$0xff]
                  %360 = vst [vmem:[%s310 + $0xc0] sm:$0xff] %v359
                  %v361 = vld [vmem:[%s309 + $0x1c8] sm:$0xff]
                  %362 = vst [vmem:[%s310 + $0xc8] sm:$0xff] %v361
                  %v363 = vld [vmem:[%s309 + $0x1d0] sm:$0xff]
                  %364 = vst [vmem:[%s310 + $0xd0] sm:$0xff] %v363
                  %v365 = vld [vmem:[%s309 + $0x1d8] sm:$0xff]
                  %366 = vst [vmem:[%s310 + $0xd8] sm:$0xff] %v365
                  %v367 = vld [vmem:[%s309 + $0x1e0] sm:$0xff]
                  %368 = vst [vmem:[%s310 + $0xe0] sm:$0xff] %v367
                  %v369 = vld [vmem:[%s309 + $0x1e8] sm:$0xff]
                  %370 = vst [vmem:[%s310 + $0xe8] sm:$0xff] %v369
                  %v371 = vld [vmem:[%s309 + $0x1f0] sm:$0xff]
                  %372 = vst [vmem:[%s310 + $0xf0] sm:$0xff] %v371
                  %v373 = vld [vmem:[%s309 + $0x1f8] sm:$0xff]
                  %374 = vst [vmem:[%s310 + $0xf8] sm:$0xff] %v373
                  %v375 = vld [vmem:[%s309 + $0x300] sm:$0xff]
                  %376 = vst [vmem:[%s310 + $0x100] sm:$0xff] %v375
                  %v377 = vld [vmem:[%s309 + $0x308] sm:$0xff]
                  %378 = vst [vmem:[%s310 + $0x108] sm:$0xff] %v377
                  %v379 = vld [vmem:[%s309 + $0x310] sm:$0xff]
                  %380 = vst [vmem:[%s310 + $0x110] sm:$0xff] %v379
                  %v381 = vld [vmem:[%s309 + $0x318] sm:$0xff]
                  %382 = vst [vmem:[%s310 + $0x118] sm:$0xff] %v381
                  %v383 = vld [vmem:[%s309 + $0x320] sm:$0xff]
                  %384 = vst [vmem:[%s310 + $0x120] sm:$0xff] %v383
                  %v385 = vld [vmem:[%s309 + $0x328] sm:$0xff]
                  %386 = vst [vmem:[%s310 + $0x128] sm:$0xff] %v385
                  %v387 = vld [vmem:[%s309 + $0x330] sm:$0xff]
                  %388 = vst [vmem:[%s310 + $0x130] sm:$0xff] %v387
                  %v389 = vld [vmem:[%s309 + $0x338] sm:$0xff]
                  %390 = vst [vmem:[%s310 + $0x138] sm:$0xff] %v389
                  %v391 = vld [vmem:[%s309 + $0x340] sm:$0xff]
                  %392 = vst [vmem:[%s310 + $0x140] sm:$0xff] %v391
                  %v393 = vld [vmem:[%s309 + $0x348] sm:$0xff]
                  %394 = vst [vmem:[%s310 + $0x148] sm:$0xff] %v393
                  %v395 = vld [vmem:[%s309 + $0x350] sm:$0xff]
                  %396 = vst [vmem:[%s310 + $0x150] sm:$0xff] %v395
                  %v397 = vld [vmem:[%s309 + $0x358] sm:$0xff]
                  %398 = vst [vmem:[%s310 + $0x158] sm:$0xff] %v397
                  %v399 = vld [vmem:[%s309 + $0x360] sm:$0xff]
                  %400 = vst [vmem:[%s310 + $0x160] sm:$0xff] %v399
                  %v401 = vld [vmem:[%s309 + $0x368] sm:$0xff]
                  %402 = vst [vmem:[%s310 + $0x168] sm:$0xff] %v401
                  %v403 = vld [vmem:[%s309 + $0x370] sm:$0xff]
                  %404 = vst [vmem:[%s310 + $0x170] sm:$0xff] %v403
                  %v405 = vld [vmem:[%s309 + $0x378] sm:$0xff]
                  %406 = vst [vmem:[%s310 + $0x178] sm:$0xff] %v405
                  %v407 = vld [vmem:[%s309 + $0x480] sm:$0xff]
                  %408 = vst [vmem:[%s310 + $0x180] sm:$0xff] %v407
                  %v409 = vld [vmem:[%s309 + $0x488] sm:$0xff]
                  %410 = vst [vmem:[%s310 + $0x188] sm:$0xff] %v409
                  %v411 = vld [vmem:[%s309 + $0x490] sm:$0xff]
                  %412 = vst [vmem:[%s310 + $0x190] sm:$0xff] %v411
                  %v413 = vld [vmem:[%s309 + $0x498] sm:$0xff]
                  %414 = vst [vmem:[%s310 + $0x198] sm:$0xff] %v413
                  %v415 = vld [vmem:[%s309 + $0x4a0] sm:$0xff]
                  %416 = vst [vmem:[%s310 + $0x1a0] sm:$0xff] %v415
                  %v417 = vld [vmem:[%s309 + $0x4a8] sm:$0xff]
                  %418 = vst [vmem:[%s310 + $0x1a8] sm:$0xff] %v417
                  %v419 = vld [vmem:[%s309 + $0x4b0] sm:$0xff]
                  %420 = vst [vmem:[%s310 + $0x1b0] sm:$0xff] %v419
                  %v421 = vld [vmem:[%s309 + $0x4b8] sm:$0xff]
                  %422 = vst [vmem:[%s310 + $0x1b8] sm:$0xff] %v421
                  %v423 = vld [vmem:[%s309 + $0x4c0] sm:$0xff]
                  %424 = vst [vmem:[%s310 + $0x1c0] sm:$0xff] %v423
                  %v425 = vld [vmem:[%s309 + $0x4c8] sm:$0xff]
                  %426 = vst [vmem:[%s310 + $0x1c8] sm:$0xff] %v425
                  %v427 = vld [vmem:[%s309 + $0x4d0] sm:$0xff]
                  %428 = vst [vmem:[%s310 + $0x1d0] sm:$0xff] %v427
                  %v429 = vld [vmem:[%s309 + $0x4d8] sm:$0xff]
                  %430 = vst [vmem:[%s310 + $0x1d8] sm:$0xff] %v429
                  %v431 = vld [vmem:[%s309 + $0x4e0] sm:$0xff]
                  %432 = vst [vmem:[%s310 + $0x1e0] sm:$0xff] %v431
                  %v433 = vld [vmem:[%s309 + $0x4e8] sm:$0xff]
                  %434 = vst [vmem:[%s310 + $0x1e8] sm:$0xff] %v433
                  %v435 = vld [vmem:[%s309 + $0x4f0] sm:$0xff]
                  %436 = vst [vmem:[%s310 + $0x1f0] sm:$0xff] %v435
                  %v437 = vld [vmem:[%s309 + $0x4f8] sm:$0xff]
                  %438 = vst [vmem:[%s310 + $0x1f8] sm:$0xff] %v437
                $region60: #{semantic_attention.2} parent=54 // loop_footer
                  %s308 = sadd.s32 1, %s304
                $region61: #{semantic_attention.2} parent=54 // loop_footer_branch
                  %303 = sbr.rel target = $region57
                $region62: #{semantic_attention.2} parent=54 // loop_exit
                  _
              $region55: #{semantic_attention.2} parent=39 // pred_fallthru
                _
              // Predicated region
              $region63: #{semantic_attention.2} parent=39 // pred_check
                _
              $region64: #{semantic_attention.2} parent=39 // pred_check_branch
                %440 = sbr.rel target = $region66
              $region65: #{semantic_attention.2} parent=39 // pred_region
                _
              $region66: #{semantic_attention.2} parent=39 // pred_fallthru
                _
            $region40: #{semantic_attention.2} parent=35 // pred_fallthru
              _
            // Predicated region
            $region41: #{semantic_attention.2} parent=35 // pred_check
              _
            $region42: #{semantic_attention.2} parent=35 // pred_check_branch
              %163 = sbr.rel target = $region44
            $region43: #{semantic_attention.2} parent=35 // pred_region
              loop: start=0, step=1, limit=1
              $region45: #{semantic_attention.2} parent=43 // loop_pre_header
                _
              $region46: #{semantic_attention.2} parent=43 // loop_header
                %s166 = sphi 0, %s170
                %p167 = scmp.ge.s32.totalorder %s166, 1
                %s171 = sphi %s157, %s157
                %s172 = sphi %s154, %s154
              $region47: #{semantic_attention.2} parent=43 // loop_header_branch
                %169 = sbr.rel (%p167) target = $region51
              $region48: #{semantic_attention.2} parent=43 // loop_body
                %v173 = vld [vmem:[%s171] sm:$0xff]
                %174 = vst [vmem:[%s172] sm:$0xff] %v173
                %v175 = vld [vmem:[%s171 + $0x8] sm:$0xff]
                %176 = vst [vmem:[%s172 + $0x8] sm:$0xff] %v175
                %v177 = vld [vmem:[%s171 + $0x10] sm:$0xff]
                %178 = vst [vmem:[%s172 + $0x10] sm:$0xff] %v177
                %v179 = vld [vmem:[%s171 + $0x18] sm:$0xff]
                %180 = vst [vmem:[%s172 + $0x18] sm:$0xff] %v179
                %v181 = vld [vmem:[%s171 + $0x20] sm:$0xff]
                %182 = vst [vmem:[%s172 + $0x20] sm:$0xff] %v181
                %v183 = vld [vmem:[%s171 + $0x28] sm:$0xff]
                %184 = vst [vmem:[%s172 + $0x28] sm:$0xff] %v183
                %v185 = vld [vmem:[%s171 + $0x30] sm:$0xff]
                %186 = vst [vmem:[%s172 + $0x30] sm:$0xff] %v185
                %v187 = vld [vmem:[%s171 + $0x38] sm:$0xff]
                %188 = vst [vmem:[%s172 + $0x38] sm:$0xff] %v187
                %v189 = vld [vmem:[%s171 + $0x40] sm:$0xff]
                %190 = vst [vmem:[%s172 + $0x40] sm:$0xff] %v189
                %v191 = vld [vmem:[%s171 + $0x48] sm:$0xff]
                %192 = vst [vmem:[%s172 + $0x48] sm:$0xff] %v191
                %v193 = vld [vmem:[%s171 + $0x50] sm:$0xff]
                %194 = vst [vmem:[%s172 + $0x50] sm:$0xff] %v193
                %v195 = vld [vmem:[%s171 + $0x58] sm:$0xff]
                %196 = vst [vmem:[%s172 + $0x58] sm:$0xff] %v195
                %v197 = vld [vmem:[%s171 + $0x60] sm:$0xff]
                %198 = vst [vmem:[%s172 + $0x60] sm:$0xff] %v197
                %v199 = vld [vmem:[%s171 + $0x68] sm:$0xff]
                %200 = vst [vmem:[%s172 + $0x68] sm:$0xff] %v199
                %v201 = vld [vmem:[%s171 + $0x70] sm:$0xff]
                %202 = vst [vmem:[%s172 + $0x70] sm:$0xff] %v201
                %v203 = vld [vmem:[%s171 + $0x78] sm:$0xff]
                %204 = vst [vmem:[%s172 + $0x78] sm:$0xff] %v203
                %v205 = vld [vmem:[%s171 + $0x180] sm:$0xff]
                %206 = vst [vmem:[%s172 + $0x80] sm:$0xff] %v205
                %v207 = vld [vmem:[%s171 + $0x188] sm:$0xff]
                %208 = vst [vmem:[%s172 + $0x88] sm:$0xff] %v207
                %v209 = vld [vmem:[%s171 + $0x190] sm:$0xff]
                %210 = vst [vmem:[%s172 + $0x90] sm:$0xff] %v209
                %v211 = vld [vmem:[%s171 + $0x198] sm:$0xff]
                %212 = vst [vmem:[%s172 + $0x98] sm:$0xff] %v211
                %v213 = vld [vmem:[%s171 + $0x1a0] sm:$0xff]
                %214 = vst [vmem:[%s172 + $0xa0] sm:$0xff] %v213
                %v215 = vld [vmem:[%s171 + $0x1a8] sm:$0xff]
                %216 = vst [vmem:[%s172 + $0xa8] sm:$0xff] %v215
                %v217 = vld [vmem:[%s171 + $0x1b0] sm:$0xff]
                %218 = vst [vmem:[%s172 + $0xb0] sm:$0xff] %v217
                %v219 = vld [vmem:[%s171 + $0x1b8] sm:$0xff]
                %220 = vst [vmem:[%s172 + $0xb8] sm:$0xff] %v219
                %v221 = vld [vmem:[%s171 + $0x1c0] sm:$0xff]
                %222 = vst [vmem:[%s172 + $0xc0] sm:$0xff] %v221
                %v223 = vld [vmem:[%s171 + $0x1c8] sm:$0xff]
                %224 = vst [vmem:[%s172 + $0xc8] sm:$0xff] %v223
                %v225 = vld [vmem:[%s171 + $0x1d0] sm:$0xff]
                %226 = vst [vmem:[%s172 + $0xd0] sm:$0xff] %v225
                %v227 = vld [vmem:[%s171 + $0x1d8] sm:$0xff]
                %228 = vst [vmem:[%s172 + $0xd8] sm:$0xff] %v227
                %v229 = vld [vmem:[%s171 + $0x1e0] sm:$0xff]
                %230 = vst [vmem:[%s172 + $0xe0] sm:$0xff] %v229
                %v231 = vld [vmem:[%s171 + $0x1e8] sm:$0xff]
                %232 = vst [vmem:[%s172 + $0xe8] sm:$0xff] %v231
                %v233 = vld [vmem:[%s171 + $0x1f0] sm:$0xff]
                %234 = vst [vmem:[%s172 + $0xf0] sm:$0xff] %v233
                %v235 = vld [vmem:[%s171 + $0x1f8] sm:$0xff]
                %236 = vst [vmem:[%s172 + $0xf8] sm:$0xff] %v235
                %v237 = vld [vmem:[%s171 + $0x300] sm:$0xff]
                %238 = vst [vmem:[%s172 + $0x100] sm:$0xff] %v237
                %v239 = vld [vmem:[%s171 + $0x308] sm:$0xff]
                %240 = vst [vmem:[%s172 + $0x108] sm:$0xff] %v239
                %v241 = vld [vmem:[%s171 + $0x310] sm:$0xff]
                %242 = vst [vmem:[%s172 + $0x110] sm:$0xff] %v241
                %v243 = vld [vmem:[%s171 + $0x318] sm:$0xff]
                %244 = vst [vmem:[%s172 + $0x118] sm:$0xff] %v243
                %v245 = vld [vmem:[%s171 + $0x320] sm:$0xff]
                %246 = vst [vmem:[%s172 + $0x120] sm:$0xff] %v245
                %v247 = vld [vmem:[%s171 + $0x328] sm:$0xff]
                %248 = vst [vmem:[%s172 + $0x128] sm:$0xff] %v247
                %v249 = vld [vmem:[%s171 + $0x330] sm:$0xff]
                %250 = vst [vmem:[%s172 + $0x130] sm:$0xff] %v249
                %v251 = vld [vmem:[%s171 + $0x338] sm:$0xff]
                %252 = vst [vmem:[%s172 + $0x138] sm:$0xff] %v251
                %v253 = vld [vmem:[%s171 + $0x340] sm:$0xff]
                %254 = vst [vmem:[%s172 + $0x140] sm:$0xff] %v253
                %v255 = vld [vmem:[%s171 + $0x348] sm:$0xff]
                %256 = vst [vmem:[%s172 + $0x148] sm:$0xff] %v255
                %v257 = vld [vmem:[%s171 + $0x350] sm:$0xff]
                %258 = vst [vmem:[%s172 + $0x150] sm:$0xff] %v257
                %v259 = vld [vmem:[%s171 + $0x358] sm:$0xff]
                %260 = vst [vmem:[%s172 + $0x158] sm:$0xff] %v259
                %v261 = vld [vmem:[%s171 + $0x360] sm:$0xff]
                %262 = vst [vmem:[%s172 + $0x160] sm:$0xff] %v261
                %v263 = vld [vmem:[%s171 + $0x368] sm:$0xff]
                %264 = vst [vmem:[%s172 + $0x168] sm:$0xff] %v263
                %v265 = vld [vmem:[%s171 + $0x370] sm:$0xff]
                %266 = vst [vmem:[%s172 + $0x170] sm:$0xff] %v265
                %v267 = vld [vmem:[%s171 + $0x378] sm:$0xff]
                %268 = vst [vmem:[%s172 + $0x178] sm:$0xff] %v267
                %v269 = vld [vmem:[%s171 + $0x480] sm:$0xff]
                %270 = vst [vmem:[%s172 + $0x180] sm:$0xff] %v269
                %v271 = vld [vmem:[%s171 + $0x488] sm:$0xff]
                %272 = vst [vmem:[%s172 + $0x188] sm:$0xff] %v271
                %v273 = vld [vmem:[%s171 + $0x490] sm:$0xff]
                %274 = vst [vmem:[%s172 + $0x190] sm:$0xff] %v273
                %v275 = vld [vmem:[%s171 + $0x498] sm:$0xff]
                %276 = vst [vmem:[%s172 + $0x198] sm:$0xff] %v275
                %v277 = vld [vmem:[%s171 + $0x4a0] sm:$0xff]
                %278 = vst [vmem:[%s172 + $0x1a0] sm:$0xff] %v277
                %v279 = vld [vmem:[%s171 + $0x4a8] sm:$0xff]
                %280 = vst [vmem:[%s172 + $0x1a8] sm:$0xff] %v279
                %v281 = vld [vmem:[%s171 + $0x4b0] sm:$0xff]
                %282 = vst [vmem:[%s172 + $0x1b0] sm:$0xff] %v281
                %v283 = vld [vmem:[%s171 + $0x4b8] sm:$0xff]
                %284 = vst [vmem:[%s172 + $0x1b8] sm:$0xff] %v283
                %v285 = vld [vmem:[%s171 + $0x4c0] sm:$0xff]
                %286 = vst [vmem:[%s172 + $0x1c0] sm:$0xff] %v285
                %v287 = vld [vmem:[%s171 + $0x4c8] sm:$0xff]
                %288 = vst [vmem:[%s172 + $0x1c8] sm:$0xff] %v287
                %v289 = vld [vmem:[%s171 + $0x4d0] sm:$0xff]
                %290 = vst [vmem:[%s172 + $0x1d0] sm:$0xff] %v289
                %v291 = vld [vmem:[%s171 + $0x4d8] sm:$0xff]
                %292 = vst [vmem:[%s172 + $0x1d8] sm:$0xff] %v291
                %v293 = vld [vmem:[%s171 + $0x4e0] sm:$0xff]
                %294 = vst [vmem:[%s172 + $0x1e0] sm:$0xff] %v293
                %v295 = vld [vmem:[%s171 + $0x4e8] sm:$0xff]
                %296 = vst [vmem:[%s172 + $0x1e8] sm:$0xff] %v295
                %v297 = vld [vmem:[%s171 + $0x4f0] sm:$0xff]
                %298 = vst [vmem:[%s172 + $0x1f0] sm:$0xff] %v297
                %v299 = vld [vmem:[%s171 + $0x4f8] sm:$0xff]
                %300 = vst [vmem:[%s172 + $0x1f8] sm:$0xff] %v299
              $region49: #{semantic_attention.2} parent=43 // loop_footer
                %s170 = sadd.s32 1, %s166
              $region50: #{semantic_attention.2} parent=43 // loop_footer_branch
                %165 = sbr.rel target = $region46
              $region51: #{semantic_attention.2} parent=43 // loop_exit
                _
            $region44: #{semantic_attention.2} parent=35 // pred_fallthru
              _
          $region36: #{semantic_attention.2} parent=31 // pred_fallthru
            _
          %441 = vnop
        $region32: #{semantic_attention.2} parent=27 // pred_fallthru
          _
      $region28: #{semantic_attention.2} parent=5 // pred_fallthru
        _
      %p442 = scmp.le.s32.totalorder 1, %s10
      %p443 = scmp.lt.s32.totalorder %s10, 4
      %p444 = pnand %p442, %p443
      %p445 = pneg %p444
      // Predicated region
      $region67: #{semantic_attention.2} parent=5 // pred_check
        _
      $region68: #{semantic_attention.2} parent=5 // pred_check_branch
        %447 = sbr.rel (%p444) target = $region70
      $region69: #{semantic_attention.2} parent=5 // pred_region
        %s448 = ssub.s32 %s10, 1
        %s449 = sand.u32 %s23, 1
        %s450 = sand.u32 %s23, 1
        %s451 = smul.addr %s450, 512
        %s452 = scalar_lea.vmem [#allocation2], %s451
        // Predicated region
        $region71: #{semantic_attention.2} parent=69 // pred_check
          %p453 = pneg %p36
        $region72: #{semantic_attention.2} parent=69 // pred_check_branch
          %455 = sbr.rel (%p453) target = $region74
        $region73: #{semantic_attention.2} parent=69 // pred_region
          _
        $region74: #{semantic_attention.2} parent=69 // pred_fallthru
          _
        %s456 = sand.u32 %s23, 1
        %s457 = sand.u32 %s23, 1
        %s458 = smul.addr %s457, 512
        %s459 = scalar_lea.vmem [#allocation2], %s458
        %p460 = pneg %p36
        %p461 = pneg %p33
        %p462 = pneg %p57
        %p463 = pneg %p54
        %p464 = pneg %p78
        %p465 = pneg %p75
        %p466 = pneg %p99
        %p467 = pneg %p96
        %p468 = pneg %p120
        %p469 = pneg %p117
        %s470 = smul.u32 16, %s15
        %p471 = scmp.eq.s32.totalorder %s15, 0
        // Predicated region
        $region75: #{semantic_attention.2} parent=69 // pred_check
          %p472 = pneg %p471
        $region76: #{semantic_attention.2} parent=69 // pred_check_branch
          %474 = sbr.rel (%p472) target = $region78
        $region77: #{semantic_attention.2} parent=69 // pred_region
          %vm475 = vcmask 3072
          %476 = vst.msk [vmem:[%s4] sm:$0xf] %vm475, 0.0
        $region78: #{semantic_attention.2} parent=69 // pred_fallthru
          _
        %v477 = vld [vmem:[%s452] sm:$0xff]
        %v478 = vld [vmem:[%s452 + $0x8] sm:$0xff]
        %v479 = vld [vmem:[%s452 + $0x10] sm:$0xff]
        %v480 = vld [vmem:[%s452 + $0x18] sm:$0xff]
        %v481 = vld [vmem:[%s452 + $0x20] sm:$0xff]
        %v482 = vld [vmem:[%s452 + $0x28] sm:$0xff]
        %v483 = vld [vmem:[%s452 + $0x30] sm:$0xff]
        %v484 = vld [vmem:[%s452 + $0x38] sm:$0xff]
        %v485 = vld [vmem:[%s452 + $0x40] sm:$0xff]
        %v486 = vld [vmem:[%s452 + $0x48] sm:$0xff]
        %v487 = vld [vmem:[%s452 + $0x50] sm:$0xff]
        %v488 = vld [vmem:[%s452 + $0x58] sm:$0xff]
        %v489 = vld [vmem:[%s452 + $0x60] sm:$0xff]
        %v490 = vld [vmem:[%s452 + $0x68] sm:$0xff]
        %v491 = vld [vmem:[%s452 + $0x70] sm:$0xff]
        %v492 = vld [vmem:[%s452 + $0x78] sm:$0xff]
        %v493 = vld [vmem:[%s452 + $0x80] sm:$0xff]
        %v494 = vld [vmem:[%s452 + $0x88] sm:$0xff]
        %v495 = vld [vmem:[%s452 + $0x90] sm:$0xff]
        %v496 = vld [vmem:[%s452 + $0x98] sm:$0xff]
        %v497 = vld [vmem:[%s452 + $0xa0] sm:$0xff]
        %v498 = vld [vmem:[%s452 + $0xa8] sm:$0xff]
        %v499 = vld [vmem:[%s452 + $0xb0] sm:$0xff]
        %v500 = vld [vmem:[%s452 + $0xb8] sm:$0xff]
        %v501 = vld [vmem:[%s452 + $0xc0] sm:$0xff]
        %v502 = vld [vmem:[%s452 + $0xc8] sm:$0xff]
        %v503 = vld [vmem:[%s452 + $0xd0] sm:$0xff]
        %v504 = vld [vmem:[%s452 + $0xd8] sm:$0xff]
        %v505 = vld [vmem:[%s452 + $0xe0] sm:$0xff]
        %v506 = vld [vmem:[%s452 + $0xe8] sm:$0xff]
        %v507 = vld [vmem:[%s452 + $0xf0] sm:$0xff]
        %v508 = vld [vmem:[%s452 + $0xf8] sm:$0xff]
        %v509 = vld [vmem:[%s452 + $0x100] sm:$0xff]
        %v510 = vld [vmem:[%s452 + $0x108] sm:$0xff]
        %v511 = vld [vmem:[%s452 + $0x110] sm:$0xff]
        %v512 = vld [vmem:[%s452 + $0x118] sm:$0xff]
        %v513 = vld [vmem:[%s452 + $0x120] sm:$0xff]
        %v514 = vld [vmem:[%s452 + $0x128] sm:$0xff]
        %v515 = vld [vmem:[%s452 + $0x130] sm:$0xff]
        %v516 = vld [vmem:[%s452 + $0x138] sm:$0xff]
        %v517 = vld [vmem:[%s452 + $0x140] sm:$0xff]
        %v518 = vld [vmem:[%s452 + $0x148] sm:$0xff]
        %v519 = vld [vmem:[%s452 + $0x150] sm:$0xff]
        %v520 = vld [vmem:[%s452 + $0x158] sm:$0xff]
        %v521 = vld [vmem:[%s452 + $0x160] sm:$0xff]
        %v522 = vld [vmem:[%s452 + $0x168] sm:$0xff]
        %v523 = vld [vmem:[%s452 + $0x170] sm:$0xff]
        %v524 = vld [vmem:[%s452 + $0x178] sm:$0xff]
        %v525 = vld [vmem:[%s452 + $0x180] sm:$0xff]
        %v526 = vld [vmem:[%s452 + $0x188] sm:$0xff]
        %v527 = vld [vmem:[%s452 + $0x190] sm:$0xff]
        %v528 = vld [vmem:[%s452 + $0x198] sm:$0xff]
        %v529 = vld [vmem:[%s452 + $0x1a0] sm:$0xff]
        %v530 = vld [vmem:[%s452 + $0x1a8] sm:$0xff]
        %v531 = vld [vmem:[%s452 + $0x1b0] sm:$0xff]
        %v532 = vld [vmem:[%s452 + $0x1b8] sm:$0xff]
        %v533 = vld [vmem:[%s452 + $0x1c0] sm:$0xff]
        %v534 = vld [vmem:[%s452 + $0x1c8] sm:$0xff]
        %v535 = vld [vmem:[%s452 + $0x1d0] sm:$0xff]
        %v536 = vld [vmem:[%s452 + $0x1d8] sm:$0xff]
        %v537 = vld [vmem:[%s452 + $0x1e0] sm:$0xff]
        %v538 = vld [vmem:[%s452 + $0x1e8] sm:$0xff]
        %v539 = vld [vmem:[%s452 + $0x1f0] sm:$0xff]
        %v540 = vld [vmem:[%s452 + $0x1f8] sm:$0xff]
        %v541 = vld [vmem:[%s1] sm:$0xff]
        %v542 = vld [vmem:[%s1 + $0x8] sm:$0xff]
        %v543 = vld [vmem:[%s1 + $0x10] sm:$0xff]
        %v544 = vld [vmem:[%s1 + $0x18] sm:$0xff]
        %v545 = vld [vmem:[%s1 + $0x20] sm:$0xff]
        %v546 = vld [vmem:[%s1 + $0x28] sm:$0xff]
        %v547 = vld [vmem:[%s1 + $0x30] sm:$0xff]
        %v548 = vld [vmem:[%s1 + $0x38] sm:$0xff]
        %v549 = vld [vmem:[%s1 + $0x40] sm:$0xff]
        %v550 = vld [vmem:[%s1 + $0x48] sm:$0xff]
        %v551 = vld [vmem:[%s1 + $0x50] sm:$0xff]
        %v552 = vld [vmem:[%s1 + $0x58] sm:$0xff]
        %v553 = vld [vmem:[%s1 + $0x60] sm:$0xff]
        %v554 = vld [vmem:[%s1 + $0x68] sm:$0xff]
        %v555 = vld [vmem:[%s1 + $0x70] sm:$0xff]
        %v556 = vld [vmem:[%s1 + $0x78] sm:$0xff]
        %v557 = vld [vmem:[%s2] sm:$0x1]
        %v559 = vlaneseq
        %v560 = vshrl.u32 %v559, 7
        %v561 = vsub.s32 0, %v560
        %v562 = vrot.slane %v557, %v561
        %564 = vmatprep.subr.mxu0 0.0
        %565 = vmatpush1.msra.mxu0 %v541
        %566 = vmatprep.subr.mxu0 0.0
        %567 = vmatpush1.msra.mxu0 %v542
        %568 = vmatprep.subr.mxu0 0.0
        %569 = vmatpush1.msra.mxu0 %v543
        %570 = vmatprep.subr.mxu0 0.0
        %571 = vmatpush1.msra.mxu0 %v544
        %572 = vmatprep.subr.mxu0 0.0
        %573 = vmatpush1.msra.mxu0 %v545
        %574 = vmatprep.subr.mxu0 0.0
        %575 = vmatpush1.msra.mxu0 %v546
        %576 = vmatprep.subr.mxu0 0.0
        %577 = vmatpush1.msra.mxu0 %v547
        %578 = vmatprep.subr.mxu0 0.0
        %579 = vmatpush1.msra.mxu0 %v548
        %580 = vmatprep.subr.mxu0 0.0
        %581 = vmatpush1.msra.mxu0 %v549
        %582 = vmatprep.subr.mxu0 0.0
        %583 = vmatpush1.msra.mxu0 %v550
        %584 = vmatprep.subr.mxu0 0.0
        %585 = vmatpush1.msra.mxu0 %v551
        %586 = vmatprep.subr.mxu0 0.0
        %587 = vmatpush1.msra.mxu0 %v552
        %588 = vmatprep.subr.mxu0 0.0
        %589 = vmatpush1.msra.mxu0 %v553
        %590 = vmatprep.subr.mxu0 0.0
        %591 = vmatpush1.msra.mxu0 %v554
        %592 = vmatprep.subr.mxu0 0.0
        %593 = vmatpush1.msra.mxu0 %v555
        %594 = vmatprep.subr.mxu0 0.0
        %595 = vmatpush1.msra.mxu0 %v556
        %596 = vmatprep.subr.mxu0 0.0
        %597 = vmatpush1.msra.mxu0 0.0
        %598 = vmatprep.subr.mxu0 0.0
        %599 = vmatpush1.msra.mxu0 0.0
        %600 = vmatprep.subr.mxu0 0.0
        %601 = vmatpush1.msra.mxu0 0.0
        %602 = vmatprep.subr.mxu0 0.0
        %603 = vmatpush1.msra.mxu0 0.0
        %604 = vmatprep.subr.mxu0 0.0
        %605 = vmatpush1.msra.mxu0 0.0
        %606 = vmatprep.subr.mxu0 0.0
        %607 = vmatpush1.msra.mxu0 0.0
        %608 = vmatprep.subr.mxu0 0.0
        %609 = vmatpush1.msra.mxu0 0.0
        %610 = vmatprep.subr.mxu0 0.0
        %611 = vmatpush1.msra.mxu0 0.0
        %612 = vmatprep.subr.mxu0 0.0
        %613 = vmatpush1.msra.mxu0 0.0
        %614 = vmatprep.subr.mxu0 0.0
        %615 = vmatpush1.msra.mxu0 0.0
        %616 = vmatprep.subr.mxu0 0.0
        %617 = vmatpush1.msra.mxu0 0.0
        %618 = vmatprep.subr.mxu0 0.0
        %619 = vmatpush1.msra.mxu0 0.0
        %620 = vmatprep.subr.mxu0 0.0
        %621 = vmatpush1.msra.mxu0 0.0
        %622 = vmatprep.subr.mxu0 0.0
        %623 = vmatpush1.msra.mxu0 0.0
        %624 = vmatprep.subr.mxu0 0.0
        %625 = vmatpush1.msra.mxu0 0.0
        %626 = vmatprep.subr.mxu0 0.0
        %627 = vmatpush1.msra.mxu0 0.0
        %628 = vmatprep.mubr.f32.mxu0 0.0
        %629 = vmatmul.mubr.f32.gmra.mrb[0].mxu0 %v477
        %v630 = vpop.f32.mrb[0].mxu0
        %v631 = vadd.f32 %v562, %v630
        %v632 = vpop.f32.mrb[0].mxu0
        %633 = vmatprep.mubr.f32.mxu0 0.0
        %634 = vmatmul.mubr.f32.gmra.mrb[0].mxu0 %v478
        %v635 = vpop.f32.mrb[0].mxu0
        %v636 = vadd.f32 %v562, %v635
        %v637 = vpop.f32.mrb[0].mxu0
        %638 = vmatprep.mubr.f32.mxu0 0.0
        %639 = vmatmul.mubr.f32.gmra.mrb[0].mxu0 %v479
        %v640 = vpop.f32.mrb[0].mxu0
        %v641 = vadd.f32 %v562, %v640
        %v642 = vpop.f32.mrb[0].mxu0
        %643 = vmatprep.mubr.f32.mxu0 0.0
        %644 = vmatmul.mubr.f32.gmra.mrb[0].mxu0 %v480
        %v645 = vpop.f32.mrb[0].mxu0
        %v646 = vadd.f32 %v562, %v645
        %v647 = vpop.f32.mrb[0].mxu0
        %648 = vmatprep.mubr.f32.mxu0 0.0
        %649 = vmatmul.mubr.f32.gmra.mrb[0].mxu0 %v481
        %v650 = vpop.f32.mrb[0].mxu0
        %v651 = vadd.f32 %v562, %v650
        %v652 = vpop.f32.mrb[0].mxu0
        %653 = vmatprep.mubr.f32.mxu0 0.0
        %654 = vmatmul.mubr.f32.gmra.mrb[0].mxu0 %v482
        %v655 = vpop.f32.mrb[0].mxu0
        %v656 = vadd.f32 %v562, %v655
        %v657 = vpop.f32.mrb[0].mxu0
        %658 = vmatprep.mubr.f32.mxu0 0.0
        %659 = vmatmul.mubr.f32.gmra.mrb[0].mxu0 %v483
        %v660 = vpop.f32.mrb[0].mxu0
        %v661 = vadd.f32 %v562, %v660
        %v662 = vpop.f32.mrb[0].mxu0
        %663 = vmatprep.mubr.f32.mxu0 0.0
        %664 = vmatmul.mubr.f32.gmra.mrb[0].mxu0 %v484
        %v665 = vpop.f32.mrb[0].mxu0
        %v666 = vadd.f32 %v562, %v665
        %v667 = vpop.f32.mrb[0].mxu0
        %668 = vmatprep.mubr.f32.mxu0 0.0
        %669 = vmatmul.mubr.f32.gmra.mrb[0].mxu0 %v485
        %v670 = vpop.f32.mrb[0].mxu0
        %v671 = vadd.f32 %v562, %v670
        %v672 = vpop.f32.mrb[0].mxu0
        %673 = vmatprep.mubr.f32.mxu0 0.0
        %674 = vmatmul.mubr.f32.gmra.mrb[0].mxu0 %v486
        %v675 = vpop.f32.mrb[0].mxu0
        %v676 = vadd.f32 %v562, %v675
        %v677 = vpop.f32.mrb[0].mxu0
        %678 = vmatprep.mubr.f32.mxu0 0.0
        %679 = vmatmul.mubr.f32.gmra.mrb[0].mxu0 %v487
        %v680 = vpop.f32.mrb[0].mxu0
        %v681 = vadd.f32 %v562, %v680
        %v682 = vpop.f32.mrb[0].mxu0
        %683 = vmatprep.mubr.f32.mxu0 0.0
        %684 = vmatmul.mubr.f32.gmra.mrb[0].mxu0 %v488
        %v685 = vpop.f32.mrb[0].mxu0
        %v686 = vadd.f32 %v562, %v685
        %v687 = vpop.f32.mrb[0].mxu0
        %688 = vmatprep.mubr.f32.mxu0 0.0
        %689 = vmatmul.mubr.f32.gmra.mrb[0].mxu0 %v489
        %v690 = vpop.f32.mrb[0].mxu0
        %v691 = vadd.f32 %v562, %v690
        %v692 = vpop.f32.mrb[0].mxu0
        %693 = vmatprep.mubr.f32.mxu0 0.0
        %694 = vmatmul.mubr.f32.gmra.mrb[0].mxu0 %v490
        %v695 = vpop.f32.mrb[0].mxu0
        %v696 = vadd.f32 %v562, %v695
        %v697 = vpop.f32.mrb[0].mxu0
        %698 = vmatprep.mubr.f32.mxu0 0.0
        %699 = vmatmul.mubr.f32.gmra.mrb[0].mxu0 %v491
        %v700 = vpop.f32.mrb[0].mxu0
        %v701 = vadd.f32 %v562, %v700
        %v702 = vpop.f32.mrb[0].mxu0
        %703 = vmatprep.mubr.f32.mxu0 0.0
        %704 = vmatmul.mubr.f32.gmra.mrb[0].mxu0 %v492
        %v705 = vpop.f32.mrb[0].mxu0
        %v706 = vadd.f32 %v562, %v705
        %v707 = vpop.f32.mrb[0].mxu0
        %708 = vmatprep.mubr.f32.mxu0 0.0
        %709 = vmatmul.mubr.f32.gmra.mrb[0].mxu0 %v493
        %v710 = vpop.f32.mrb[0].mxu0
        %v711 = vadd.f32 %v562, %v710
        %v712 = vpop.f32.mrb[0].mxu0
        %713 = vmatprep.mubr.f32.mxu0 0.0
        %714 = vmatmul.mubr.f32.gmra.mrb[0].mxu0 %v494
        %v715 = vpop.f32.mrb[0].mxu0
        %v716 = vadd.f32 %v562, %v715
        %v717 = vpop.f32.mrb[0].mxu0
        %718 = vmatprep.mubr.f32.mxu0 0.0
        %719 = vmatmul.mubr.f32.gmra.mrb[0].mxu0 %v495
        %v720 = vpop.f32.mrb[0].mxu0
        %v721 = vadd.f32 %v562, %v720
        %v722 = vpop.f32.mrb[0].mxu0
        %723 = vmatprep.mubr.f32.mxu0 0.0
        %724 = vmatmul.mubr.f32.gmra.mrb[0].mxu0 %v496
        %v725 = vpop.f32.mrb[0].mxu0
        %v726 = vadd.f32 %v562, %v725
        %v727 = vpop.f32.mrb[0].mxu0
        %728 = vmatprep.mubr.f32.mxu0 0.0
        %729 = vmatmul.mubr.f32.gmra.mrb[0].mxu0 %v497
        %v730 = vpop.f32.mrb[0].mxu0
        %v731 = vadd.f32 %v562, %v730
        %v732 = vpop.f32.mrb[0].mxu0
        %733 = vmatprep.mubr.f32.mxu0 0.0
        %734 = vmatmul.mubr.f32.gmra.mrb[0].mxu0 %v498
        %v735 = vpop.f32.mrb[0].mxu0
        %v736 = vadd.f32 %v562, %v735
        %v737 = vpop.f32.mrb[0].mxu0
        %738 = vmatprep.mubr.f32.mxu0 0.0
        %739 = vmatmul.mubr.f32.gmra.mrb[0].mxu0 %v499
        %v740 = vpop.f32.mrb[0].mxu0
        %v741 = vadd.f32 %v562, %v740
        %v742 = vpop.f32.mrb[0].mxu0
        %743 = vmatprep.mubr.f32.mxu0 0.0
        %744 = vmatmul.mubr.f32.gmra.mrb[0].mxu0 %v500
        %v745 = vpop.f32.mrb[0].mxu0
        %v746 = vadd.f32 %v562, %v745
        %v747 = vpop.f32.mrb[0].mxu0
        %748 = vmatprep.mubr.f32.mxu0 0.0
        %749 = vmatmul.mubr.f32.gmra.mrb[0].mxu0 %v501
        %v750 = vpop.f32.mrb[0].mxu0
        %v751 = vadd.f32 %v562, %v750
        %v752 = vpop.f32.mrb[0].mxu0
        %753 = vmatprep.mubr.f32.mxu0 0.0
        %754 = vmatmul.mubr.f32.gmra.mrb[0].mxu0 %v502
        %v755 = vpop.f32.mrb[0].mxu0
        %v756 = vadd.f32 %v562, %v755
        %v757 = vpop.f32.mrb[0].mxu0
        %758 = vmatprep.mubr.f32.mxu0 0.0
        %759 = vmatmul.mubr.f32.gmra.mrb[0].mxu0 %v503
        %v760 = vpop.f32.mrb[0].mxu0
        %v761 = vadd.f32 %v562, %v760
        %v762 = vpop.f32.mrb[0].mxu0
        %763 = vmatprep.mubr.f32.mxu0 0.0
        %764 = vmatmul.mubr.f32.gmra.mrb[0].mxu0 %v504
        %v765 = vpop.f32.mrb[0].mxu0
        %v766 = vadd.f32 %v562, %v765
        %v767 = vpop.f32.mrb[0].mxu0
        %768 = vmatprep.mubr.f32.mxu0 0.0
        %769 = vmatmul.mubr.f32.gmra.mrb[0].mxu0 %v505
        %v770 = vpop.f32.mrb[0].mxu0
        %v771 = vadd.f32 %v562, %v770
        %v772 = vpop.f32.mrb[0].mxu0
        %773 = vmatprep.mubr.f32.mxu0 0.0
        %774 = vmatmul.mubr.f32.gmra.mrb[0].mxu0 %v506
        %v775 = vpop.f32.mrb[0].mxu0
        %v776 = vadd.f32 %v562, %v775
        %v777 = vpop.f32.mrb[0].mxu0
        %778 = vmatprep.mubr.f32.mxu0 0.0
        %779 = vmatmul.mubr.f32.gmra.mrb[0].mxu0 %v507
        %v780 = vpop.f32.mrb[0].mxu0
        %v781 = vadd.f32 %v562, %v780
        %v782 = vpop.f32.mrb[0].mxu0
        %783 = vmatprep.mubr.f32.mxu0 0.0
        %784 = vmatmul.mubr.f32.gmra.mrb[0].mxu0 %v508
        %v785 = vpop.f32.mrb[0].mxu0
        %v786 = vadd.f32 %v562, %v785
        %v787 = vpop.f32.mrb[0].mxu0
        %788 = vmatprep.mubr.f32.mxu0 0.0
        %789 = vmatmul.mubr.f32.gmra.mrb[0].mxu0 %v509
        %v790 = vpop.f32.mrb[0].mxu0
        %v791 = vadd.f32 %v562, %v790
        %v792 = vpop.f32.mrb[0].mxu0
        %793 = vmatprep.mubr.f32.mxu0 0.0
        %794 = vmatmul.mubr.f32.gmra.mrb[0].mxu0 %v510
        %v795 = vpop.f32.mrb[0].mxu0
        %v796 = vadd.f32 %v562, %v795
        %v797 = vpop.f32.mrb[0].mxu0
        %798 = vmatprep.mubr.f32.mxu0 0.0
        %799 = vmatmul.mubr.f32.gmra.mrb[0].mxu0 %v511
        %v800 = vpop.f32.mrb[0].mxu0
        %v801 = vadd.f32 %v562, %v800
        %v802 = vpop.f32.mrb[0].mxu0
        %803 = vmatprep.mubr.f32.mxu0 0.0
        %804 = vmatmul.mubr.f32.gmra.mrb[0].mxu0 %v512
        %v805 = vpop.f32.mrb[0].mxu0
        %v806 = vadd.f32 %v562, %v805
        %v807 = vpop.f32.mrb[0].mxu0
        %808 = vmatprep.mubr.f32.mxu0 0.0
        %809 = vmatmul.mubr.f32.gmra.mrb[0].mxu0 %v513
        %v810 = vpop.f32.mrb[0].mxu0
        %v811 = vadd.f32 %v562, %v810
        %v812 = vpop.f32.mrb[0].mxu0
        %813 = vmatprep.mubr.f32.mxu0 0.0
        %814 = vmatmul.mubr.f32.gmra.mrb[0].mxu0 %v514
        %v815 = vpop.f32.mrb[0].mxu0
        %v816 = vadd.f32 %v562, %v815
        %v817 = vpop.f32.mrb[0].mxu0
        %818 = vmatprep.mubr.f32.mxu0 0.0
        %819 = vmatmul.mubr.f32.gmra.mrb[0].mxu0 %v515
        %v820 = vpop.f32.mrb[0].mxu0
        %v821 = vadd.f32 %v562, %v820
        %v822 = vpop.f32.mrb[0].mxu0
        %823 = vmatprep.mubr.f32.mxu0 0.0
        %824 = vmatmul.mubr.f32.gmra.mrb[0].mxu0 %v516
        %v825 = vpop.f32.mrb[0].mxu0
        %v826 = vadd.f32 %v562, %v825
        %v827 = vpop.f32.mrb[0].mxu0
        %828 = vmatprep.mubr.f32.mxu0 0.0
        %829 = vmatmul.mubr.f32.gmra.mrb[0].mxu0 %v517
        %v830 = vpop.f32.mrb[0].mxu0
        %v831 = vadd.f32 %v562, %v830
        %v832 = vpop.f32.mrb[0].mxu0
        %833 = vmatprep.mubr.f32.mxu0 0.0
        %834 = vmatmul.mubr.f32.gmra.mrb[0].mxu0 %v518
        %v835 = vpop.f32.mrb[0].mxu0
        %v836 = vadd.f32 %v562, %v835
        %v837 = vpop.f32.mrb[0].mxu0
        %838 = vmatprep.mubr.f32.mxu0 0.0
        %839 = vmatmul.mubr.f32.gmra.mrb[0].mxu0 %v519
        %v840 = vpop.f32.mrb[0].mxu0
        %v841 = vadd.f32 %v562, %v840
        %v842 = vpop.f32.mrb[0].mxu0
        %843 = vmatprep.mubr.f32.mxu0 0.0
        %844 = vmatmul.mubr.f32.gmra.mrb[0].mxu0 %v520
        %v845 = vpop.f32.mrb[0].mxu0
        %v846 = vadd.f32 %v562, %v845
        %v847 = vpop.f32.mrb[0].mxu0
        %848 = vmatprep.mubr.f32.mxu0 0.0
        %849 = vmatmul.mubr.f32.gmra.mrb[0].mxu0 %v521
        %v850 = vpop.f32.mrb[0].mxu0
        %v851 = vadd.f32 %v562, %v850
        %v852 = vpop.f32.mrb[0].mxu0
        %853 = vmatprep.mubr.f32.mxu0 0.0
        %854 = vmatmul.mubr.f32.gmra.mrb[0].mxu0 %v522
        %v855 = vpop.f32.mrb[0].mxu0
        %v856 = vadd.f32 %v562, %v855
        %v857 = vpop.f32.mrb[0].mxu0
        %858 = vmatprep.mubr.f32.mxu0 0.0
        %859 = vmatmul.mubr.f32.gmra.mrb[0].mxu0 %v523
        %v860 = vpop.f32.mrb[0].mxu0
        %v861 = vadd.f32 %v562, %v860
        %v862 = vpop.f32.mrb[0].mxu0
        %863 = vmatprep.mubr.f32.mxu0 0.0
        %864 = vmatmul.mubr.f32.gmra.mrb[0].mxu0 %v524
        %v865 = vpop.f32.mrb[0].mxu0
        %v866 = vadd.f32 %v562, %v865
        %v867 = vpop.f32.mrb[0].mxu0
        %868 = vmatprep.mubr.f32.mxu0 0.0
        %869 = vmatmul.mubr.f32.gmra.mrb[0].mxu0 %v525
        %v870 = vpop.f32.mrb[0].mxu0
        %v871 = vadd.f32 %v562, %v870
        %v872 = vpop.f32.mrb[0].mxu0
        %873 = vmatprep.mubr.f32.mxu0 0.0
        %874 = vmatmul.mubr.f32.gmra.mrb[0].mxu0 %v526
        %v875 = vpop.f32.mrb[0].mxu0
        %v876 = vadd.f32 %v562, %v875
        %v877 = vpop.f32.mrb[0].mxu0
        %878 = vmatprep.mubr.f32.mxu0 0.0
        %879 = vmatmul.mubr.f32.gmra.mrb[0].mxu0 %v527
        %v880 = vpop.f32.mrb[0].mxu0
        %v881 = vadd.f32 %v562, %v880
        %v882 = vpop.f32.mrb[0].mxu0
        %883 = vmatprep.mubr.f32.mxu0 0.0
        %884 = vmatmul.mubr.f32.gmra.mrb[0].mxu0 %v528
        %v885 = vpop.f32.mrb[0].mxu0
        %v886 = vadd.f32 %v562, %v885
        %v887 = vpop.f32.mrb[0].mxu0
        %888 = vmatprep.mubr.f32.mxu0 0.0
        %889 = vmatmul.mubr.f32.gmra.mrb[0].mxu0 %v529
        %v890 = vpop.f32.mrb[0].mxu0
        %v891 = vadd.f32 %v562, %v890
        %v892 = vpop.f32.mrb[0].mxu0
        %893 = vmatprep.mubr.f32.mxu0 0.0
        %894 = vmatmul.mubr.f32.gmra.mrb[0].mxu0 %v530
        %v895 = vpop.f32.mrb[0].mxu0
        %v896 = vadd.f32 %v562, %v895
        %v897 = vpop.f32.mrb[0].mxu0
        %898 = vmatprep.mubr.f32.mxu0 0.0
        %899 = vmatmul.mubr.f32.gmra.mrb[0].mxu0 %v531
        %v900 = vpop.f32.mrb[0].mxu0
        %v901 = vadd.f32 %v562, %v900
        %v902 = vpop.f32.mrb[0].mxu0
        %903 = vmatprep.mubr.f32.mxu0 0.0
        %904 = vmatmul.mubr.f32.gmra.mrb[0].mxu0 %v532
        %v905 = vpop.f32.mrb[0].mxu0
        %v906 = vadd.f32 %v562, %v905
        %v907 = vpop.f32.mrb[0].mxu0
        %908 = vmatprep.mubr.f32.mxu0 0.0
        %909 = vmatmul.mubr.f32.gmra.mrb[0].mxu0 %v533
        %v910 = vpop.f32.mrb[0].mxu0
        %v911 = vadd.f32 %v562, %v910
        %v912 = vpop.f32.mrb[0].mxu0
        %913 = vmatprep.mubr.f32.mxu0 0.0
        %914 = vmatmul.mubr.f32.gmra.mrb[0].mxu0 %v534
        %v915 = vpop.f32.mrb[0].mxu0
        %v916 = vadd.f32 %v562, %v915
        %v917 = vpop.f32.mrb[0].mxu0
        %918 = vmatprep.mubr.f32.mxu0 0.0
        %919 = vmatmul.mubr.f32.gmra.mrb[0].mxu0 %v535
        %v920 = vpop.f32.mrb[0].mxu0
        %v921 = vadd.f32 %v562, %v920
        %v922 = vpop.f32.mrb[0].mxu0
        %923 = vmatprep.mubr.f32.mxu0 0.0
        %924 = vmatmul.mubr.f32.gmra.mrb[0].mxu0 %v536
        %v925 = vpop.f32.mrb[0].mxu0
        %v926 = vadd.f32 %v562, %v925
        %v927 = vpop.f32.mrb[0].mxu0
        %928 = vmatprep.mubr.f32.mxu0 0.0
        %929 = vmatmul.mubr.f32.gmra.mrb[0].mxu0 %v537
        %v930 = vpop.f32.mrb[0].mxu0
        %v931 = vadd.f32 %v562, %v930
        %v932 = vpop.f32.mrb[0].mxu0
        %933 = vmatprep.mubr.f32.mxu0 0.0
        %934 = vmatmul.mubr.f32.gmra.mrb[0].mxu0 %v538
        %v935 = vpop.f32.mrb[0].mxu0
        %v936 = vadd.f32 %v562, %v935
        %v937 = vpop.f32.mrb[0].mxu0
        %938 = vmatprep.mubr.f32.mxu0 0.0
        %939 = vmatmul.mubr.f32.gmra.mrb[0].mxu0 %v539
        %v940 = vpop.f32.mrb[0].mxu0
        %v941 = vadd.f32 %v562, %v940
        %v942 = vpop.f32.mrb[0].mxu0
        %943 = vmatprep.mubr.f32.mxu0 0.0
        %944 = vmatmul.mubr.f32.gmra.mrb[0].mxu0 %v540
        %v945 = vpop.f32.mrb[0].mxu0
        %v946 = vadd.f32 %v562, %v945
        %v947 = vpop.f32.mrb[0].mxu0
        %948 = vdwg.mxu0
        %v949 = vtanh.pop %v631
        %v950 = vtanh.pop %v636
        %v951 = vtanh.pop %v641
        %v952 = vtanh.pop %v646
        %v953 = vtanh.pop %v651
        %v954 = vtanh.pop %v656
        %v955 = vtanh.pop %v661
        %v956 = vtanh.pop %v666
        %v957 = vtanh.pop %v671
        %v958 = vtanh.pop %v676
        %v959 = vtanh.pop %v681
        %v960 = vtanh.pop %v686
        %v961 = vtanh.pop %v691
        %v962 = vtanh.pop %v696
        %v963 = vtanh.pop %v701
        %v964 = vtanh.pop %v706
        %v965 = vtanh.pop %v711
        %v966 = vtanh.pop %v716
        %v967 = vtanh.pop %v721
        %v968 = vtanh.pop %v726
        %v969 = vtanh.pop %v731
        %v970 = vtanh.pop %v736
        %v971 = vtanh.pop %v741
        %v972 = vtanh.pop %v746
        %v973 = vtanh.pop %v751
        %v974 = vtanh.pop %v756
        %v975 = vtanh.pop %v761
        %v976 = vtanh.pop %v766
        %v977 = vtanh.pop %v771
        %v978 = vtanh.pop %v776
        %v979 = vtanh.pop %v781
        %v980 = vtanh.pop %v786
        %v981 = vtanh.pop %v791
        %v982 = vtanh.pop %v796
        %v983 = vtanh.pop %v801
        %v984 = vtanh.pop %v806
        %v985 = vtanh.pop %v811
        %v986 = vtanh.pop %v816
        %v987 = vtanh.pop %v821
        %v988 = vtanh.pop %v826
        %v989 = vtanh.pop %v831
        %v990 = vtanh.pop %v836
        %v991 = vtanh.pop %v841
        %v992 = vtanh.pop %v846
        %v993 = vtanh.pop %v851
        %v994 = vtanh.pop %v856
        %v995 = vtanh.pop %v861
        %v996 = vtanh.pop %v866
        %v997 = vtanh.pop %v871
        %v998 = vtanh.pop %v876
        %v999 = vtanh.pop %v881
        %v1000 = vtanh.pop %v886
        %v1001 = vtanh.pop %v891
        %v1002 = vtanh.pop %v896
        %v1003 = vtanh.pop %v901
        %v1004 = vtanh.pop %v906
        %v1005 = vtanh.pop %v911
        %v1006 = vtanh.pop %v916
        %v1007 = vtanh.pop %v921
        %v1008 = vtanh.pop %v926
        %v1009 = vtanh.pop %v931
        %v1010 = vtanh.pop %v936
        %v1011 = vtanh.pop %v941
        %v1012 = vtanh.pop %v946
        %v1013 = vld [vmem:[%s3] sm:$0x1]
        %v1015 = vlaneseq
        %v1016 = vshrl.u32 %v1015, 7
        %v1017 = vsub.s32 0, %v1016
        %v1018 = vrot.slane %v1013, %v1017
        %v1020 = vmul.f32 %v949, %v1018
        %v1021 = vmul.f32 %v950, %v1018
        %v1022 = vmul.f32 %v951, %v1018
        %v1023 = vmul.f32 %v952, %v1018
        %v1024 = vmul.f32 %v953, %v1018
        %v1025 = vmul.f32 %v954, %v1018
        %v1026 = vmul.f32 %v955, %v1018
        %v1027 = vmul.f32 %v956, %v1018
        %v1028 = vmul.f32 %v957, %v1018
        %v1029 = vmul.f32 %v958, %v1018
        %v1030 = vmul.f32 %v959, %v1018
        %v1031 = vmul.f32 %v960, %v1018
        %v1032 = vmul.f32 %v961, %v1018
        %v1033 = vmul.f32 %v962, %v1018
        %v1034 = vmul.f32 %v963, %v1018
        %v1035 = vmul.f32 %v964, %v1018
        %v1036 = vmul.f32 %v965, %v1018
        %v1037 = vmul.f32 %v966, %v1018
        %v1038 = vmul.f32 %v967, %v1018
        %v1039 = vmul.f32 %v968, %v1018
        %v1040 = vmul.f32 %v969, %v1018
        %v1041 = vmul.f32 %v970, %v1018
        %v1042 = vmul.f32 %v971, %v1018
        %v1043 = vmul.f32 %v972, %v1018
        %v1044 = vmul.f32 %v973, %v1018
        %v1045 = vmul.f32 %v974, %v1018
        %v1046 = vmul.f32 %v975, %v1018
        %v1047 = vmul.f32 %v976, %v1018
        %v1048 = vmul.f32 %v977, %v1018
        %v1049 = vmul.f32 %v978, %v1018
        %v1050 = vmul.f32 %v979, %v1018
        %v1051 = vmul.f32 %v980, %v1018
        %v1052 = vmul.f32 %v981, %v1018
        %v1053 = vmul.f32 %v982, %v1018
        %v1054 = vmul.f32 %v983, %v1018
        %v1055 = vmul.f32 %v984, %v1018
        %v1056 = vmul.f32 %v985, %v1018
        %v1057 = vmul.f32 %v986, %v1018
        %v1058 = vmul.f32 %v987, %v1018
        %v1059 = vmul.f32 %v988, %v1018
        %v1060 = vmul.f32 %v989, %v1018
        %v1061 = vmul.f32 %v990, %v1018
        %v1062 = vmul.f32 %v991, %v1018
        %v1063 = vmul.f32 %v992, %v1018
        %v1064 = vmul.f32 %v993, %v1018
        %v1065 = vmul.f32 %v994, %v1018
        %v1066 = vmul.f32 %v995, %v1018
        %v1067 = vmul.f32 %v996, %v1018
        %v1068 = vmul.f32 %v997, %v1018
        %v1069 = vmul.f32 %v998, %v1018
        %v1070 = vmul.f32 %v999, %v1018
        %v1071 = vmul.f32 %v1000, %v1018
        %v1072 = vmul.f32 %v1001, %v1018
        %v1073 = vmul.f32 %v1002, %v1018
        %v1074 = vmul.f32 %v1003, %v1018
        %v1075 = vmul.f32 %v1004, %v1018
        %v1076 = vmul.f32 %v1005, %v1018
        %v1077 = vmul.f32 %v1006, %v1018
        %v1078 = vmul.f32 %v1007, %v1018
        %v1079 = vmul.f32 %v1008, %v1018
        %v1080 = vmul.f32 %v1009, %v1018
        %v1081 = vmul.f32 %v1010, %v1018
        %v1082 = vmul.f32 %v1011, %v1018
        %v1083 = vmul.f32 %v1012, %v1018
        %1084 = vadd.xlane.f32.xlu0 %v1020
        %v1085 = vpop.xlane.xlu0 %1084
        %1086 = vadd.xlane.f32.xlu0 %v1021
        %v1087 = vpop.xlane.xlu0 %1086
        %1088 = vadd.xlane.f32.xlu0 %v1022
        %v1089 = vpop.xlane.xlu0 %1088
        %1090 = vadd.xlane.f32.xlu0 %v1023
        %v1091 = vpop.xlane.xlu0 %1090
        %1092 = vadd.xlane.f32.xlu0 %v1024
        %v1093 = vpop.xlane.xlu0 %1092
        %1094 = vadd.xlane.f32.xlu0 %v1025
        %v1095 = vpop.xlane.xlu0 %1094
        %1096 = vadd.xlane.f32.xlu0 %v1026
        %v1097 = vpop.xlane.xlu0 %1096
        %1098 = vadd.xlane.f32.xlu0 %v1027
        %v1099 = vpop.xlane.xlu0 %1098
        %1100 = vadd.xlane.f32.xlu0 %v1028
        %v1101 = vpop.xlane.xlu0 %1100
        %1102 = vadd.xlane.f32.xlu0 %v1029
        %v1103 = vpop.xlane.xlu0 %1102
        %1104 = vadd.xlane.f32.xlu0 %v1030
        %v1105 = vpop.xlane.xlu0 %1104
        %1106 = vadd.xlane.f32.xlu0 %v1031
        %v1107 = vpop.xlane.xlu0 %1106
        %1108 = vadd.xlane.f32.xlu0 %v1032
        %v1109 = vpop.xlane.xlu0 %1108
        %1110 = vadd.xlane.f32.xlu0 %v1033
        %v1111 = vpop.xlane.xlu0 %1110
        %1112 = vadd.xlane.f32.xlu0 %v1034
        %v1113 = vpop.xlane.xlu0 %1112
        %1114 = vadd.xlane.f32.xlu0 %v1035
        %v1115 = vpop.xlane.xlu0 %1114
        %1116 = vadd.xlane.f32.xlu0 %v1036
        %v1117 = vpop.xlane.xlu0 %1116
        %1118 = vadd.xlane.f32.xlu0 %v1037
        %v1119 = vpop.xlane.xlu0 %1118
        %1120 = vadd.xlane.f32.xlu0 %v1038
        %v1121 = vpop.xlane.xlu0 %1120
        %1122 = vadd.xlane.f32.xlu0 %v1039
        %v1123 = vpop.xlane.xlu0 %1122
        %1124 = vadd.xlane.f32.xlu0 %v1040
        %v1125 = vpop.xlane.xlu0 %1124
        %1126 = vadd.xlane.f32.xlu0 %v1041
        %v1127 = vpop.xlane.xlu0 %1126
        %1128 = vadd.xlane.f32.xlu0 %v1042
        %v1129 = vpop.xlane.xlu0 %1128
        %1130 = vadd.xlane.f32.xlu0 %v1043
        %v1131 = vpop.xlane.xlu0 %1130
        %1132 = vadd.xlane.f32.xlu0 %v1044
        %v1133 = vpop.xlane.xlu0 %1132
        %1134 = vadd.xlane.f32.xlu0 %v1045
        %v1135 = vpop.xlane.xlu0 %1134
        %1136 = vadd.xlane.f32.xlu0 %v1046
        %v1137 = vpop.xlane.xlu0 %1136
        %1138 = vadd.xlane.f32.xlu0 %v1047
        %v1139 = vpop.xlane.xlu0 %1138
        %1140 = vadd.xlane.f32.xlu0 %v1048
        %v1141 = vpop.xlane.xlu0 %1140
        %1142 = vadd.xlane.f32.xlu0 %v1049
        %v1143 = vpop.xlane.xlu0 %1142
        %1144 = vadd.xlane.f32.xlu0 %v1050
        %v1145 = vpop.xlane.xlu0 %1144
        %1146 = vadd.xlane.f32.xlu0 %v1051
        %v1147 = vpop.xlane.xlu0 %1146
        %1148 = vadd.xlane.f32.xlu0 %v1052
        %v1149 = vpop.xlane.xlu0 %1148
        %1150 = vadd.xlane.f32.xlu0 %v1053
        %v1151 = vpop.xlane.xlu0 %1150
        %1152 = vadd.xlane.f32.xlu0 %v1054
        %v1153 = vpop.xlane.xlu0 %1152
        %1154 = vadd.xlane.f32.xlu0 %v1055
        %v1155 = vpop.xlane.xlu0 %1154
        %1156 = vadd.xlane.f32.xlu0 %v1056
        %v1157 = vpop.xlane.xlu0 %1156
        %1158 = vadd.xlane.f32.xlu0 %v1057
        %v1159 = vpop.xlane.xlu0 %1158
        %1160 = vadd.xlane.f32.xlu0 %v1058
        %v1161 = vpop.xlane.xlu0 %1160
        %1162 = vadd.xlane.f32.xlu0 %v1059
        %v1163 = vpop.xlane.xlu0 %1162
        %1164 = vadd.xlane.f32.xlu0 %v1060
        %v1165 = vpop.xlane.xlu0 %1164
        %1166 = vadd.xlane.f32.xlu0 %v1061
        %v1167 = vpop.xlane.xlu0 %1166
        %1168 = vadd.xlane.f32.xlu0 %v1062
        %v1169 = vpop.xlane.xlu0 %1168
        %1170 = vadd.xlane.f32.xlu0 %v1063
        %v1171 = vpop.xlane.xlu0 %1170
        %1172 = vadd.xlane.f32.xlu0 %v1064
        %v1173 = vpop.xlane.xlu0 %1172
        %1174 = vadd.xlane.f32.xlu0 %v1065
        %v1175 = vpop.xlane.xlu0 %1174
        %1176 = vadd.xlane.f32.xlu0 %v1066
        %v1177 = vpop.xlane.xlu0 %1176
        %1178 = vadd.xlane.f32.xlu0 %v1067
        %v1179 = vpop.xlane.xlu0 %1178
        %1180 = vadd.xlane.f32.xlu0 %v1068
        %v1181 = vpop.xlane.xlu0 %1180
        %1182 = vadd.xlane.f32.xlu0 %v1069
        %v1183 = vpop.xlane.xlu0 %1182
        %1184 = vadd.xlane.f32.xlu0 %v1070
        %v1185 = vpop.xlane.xlu0 %1184
        %1186 = vadd.xlane.f32.xlu0 %v1071
        %v1187 = vpop.xlane.xlu0 %1186
        %1188 = vadd.xlane.f32.xlu0 %v1072
        %v1189 = vpop.xlane.xlu0 %1188
        %1190 = vadd.xlane.f32.xlu0 %v1073
        %v1191 = vpop.xlane.xlu0 %1190
        %1192 = vadd.xlane.f32.xlu0 %v1074
        %v1193 = vpop.xlane.xlu0 %1192
        %1194 = vadd.xlane.f32.xlu0 %v1075
        %v1195 = vpop.xlane.xlu0 %1194
        %1196 = vadd.xlane.f32.xlu0 %v1076
        %v1197 = vpop.xlane.xlu0 %1196
        %1198 = vadd.xlane.f32.xlu0 %v1077
        %v1199 = vpop.xlane.xlu0 %1198
        %1200 = vadd.xlane.f32.xlu0 %v1078
        %v1201 = vpop.xlane.xlu0 %1200
        %1202 = vadd.xlane.f32.xlu0 %v1079
        %v1203 = vpop.xlane.xlu0 %1202
        %1204 = vadd.xlane.f32.xlu0 %v1080
        %v1205 = vpop.xlane.xlu0 %1204
        %1206 = vadd.xlane.f32.xlu0 %v1081
        %v1207 = vpop.xlane.xlu0 %1206
        %1208 = vadd.xlane.f32.xlu0 %v1082
        %v1209 = vpop.xlane.xlu0 %1208
        %1210 = vadd.xlane.f32.xlu0 %v1083
        %v1211 = vpop.xlane.xlu0 %1210
        %s1212 = smul.u32 %s15, 128
        %v1213 = vlaneseq
        %v1214 = vand.u32 %v1213, 127
        %v1215 = vstv %s1212
        %v1216 = vadd.s32 %v1215, %v1214
        %vm1217 = vcmp.lt.s32.totalorder %v1216, 300
        %v1218 = vsel %vm1217, 1, 0
        %vm1219 = vcmp.eq.s32.totalorder %v1218, 1
        %v1284 = vlaneseq
        %v1285 = vshrl.u32 %v1284, 7
        %v1286 = vsub.s32 %v1214, %v1285
        %v1287 = vrot.slane %v1085, %v1286
        %v1288 = vadd.s32 %v1214, 4294967288
        %v1289 = vlaneseq
        %v1290 = vshrl.u32 %v1289, 7
        %v1291 = vsub.s32 %v1288, %v1290
        %v1292 = vrot.slane %v1087, %v1291
        %vm1293 = vcmask 130112
        %v1294 = vsel %vm1293, %v1292, %v1287
        %v1295 = vadd.s32 %v1214, 4294967280
        %v1296 = vlaneseq
        %v1297 = vshrl.u32 %v1296, 7
        %v1298 = vsub.s32 %v1295, %v1297
        %v1299 = vrot.slane %v1089, %v1298
        %vm1300 = vcmask 195712
        %v1301 = vsel %vm1300, %v1299, %v1294
        %v1302 = vadd.s32 %v1214, 4294967272
        %v1303 = vlaneseq
        %v1304 = vshrl.u32 %v1303, 7
        %v1305 = vsub.s32 %v1302, %v1304
        %v1306 = vrot.slane %v1091, %v1305
        %vm1307 = vcmask 261312
        %v1308 = vsel %vm1307, %v1306, %v1301
        %v1309 = vadd.s32 %v1214, 4294967264
        %v1310 = vlaneseq
        %v1311 = vshrl.u32 %v1310, 7
        %v1312 = vsub.s32 %v1309, %v1311
        %v1313 = vrot.slane %v1093, %v1312
        %vm1314 = vcmask 326912
        %v1315 = vsel %vm1314, %v1313, %v1308
        %v1316 = vadd.s32 %v1214, 4294967256
        %v1317 = vlaneseq
        %v1318 = vshrl.u32 %v1317, 7
        %v1319 = vsub.s32 %v1316, %v1318
        %v1320 = vrot.slane %v1095, %v1319
        %vm1321 = vcmask 392512
        %v1322 = vsel %vm1321, %v1320, %v1315
        %v1323 = vadd.s32 %v1214, 4294967248
        %v1324 = vlaneseq
        %v1325 = vshrl.u32 %v1324, 7
        %v1326 = vsub.s32 %v1323, %v1325
        %v1327 = vrot.slane %v1097, %v1326
        %vm1328 = vcmask 458112
        %v1329 = vsel %vm1328, %v1327, %v1322
        %v1330 = vadd.s32 %v1214, 4294967240
        %v1331 = vlaneseq
        %v1332 = vshrl.u32 %v1331, 7
        %v1333 = vsub.s32 %v1330, %v1332
        %v1334 = vrot.slane %v1099, %v1333
        %vm1335 = vcmask 523712
        %v1336 = vsel %vm1335, %v1334, %v1329
        %v1337 = vadd.s32 %v1214, 4294967232
        %v1338 = vlaneseq
        %v1339 = vshrl.u32 %v1338, 7
        %v1340 = vsub.s32 %v1337, %v1339
        %v1341 = vrot.slane %v1101, %v1340
        %vm1342 = vcmask 589312
        %v1343 = vsel %vm1342, %v1341, %v1336
        %v1344 = vadd.s32 %v1214, 4294967224
        %v1345 = vlaneseq
        %v1346 = vshrl.u32 %v1345, 7
        %v1347 = vsub.s32 %v1344, %v1346
        %v1348 = vrot.slane %v1103, %v1347
        %vm1349 = vcmask 654912
        %v1350 = vsel %vm1349, %v1348, %v1343
        %v1351 = vadd.s32 %v1214, 4294967216
        %v1352 = vlaneseq
        %v1353 = vshrl.u32 %v1352, 7
        %v1354 = vsub.s32 %v1351, %v1353
        %v1355 = vrot.slane %v1105, %v1354
        %vm1356 = vcmask 720512
        %v1357 = vsel %vm1356, %v1355, %v1350
        %v1358 = vadd.s32 %v1214, 4294967208
        %v1359 = vlaneseq
        %v1360 = vshrl.u32 %v1359, 7
        %v1361 = vsub.s32 %v1358, %v1360
        %v1362 = vrot.slane %v1107, %v1361
        %vm1363 = vcmask 786112
        %v1364 = vsel %vm1363, %v1362, %v1357
        %v1365 = vadd.s32 %v1214, 4294967200
        %v1366 = vlaneseq
        %v1367 = vshrl.u32 %v1366, 7
        %v1368 = vsub.s32 %v1365, %v1367
        %v1369 = vrot.slane %v1109, %v1368
        %vm1370 = vcmask 851712
        %v1371 = vsel %vm1370, %v1369, %v1364
        %v1372 = vadd.s32 %v1214, 4294967192
        %v1373 = vlaneseq
        %v1374 = vshrl.u32 %v1373, 7
        %v1375 = vsub.s32 %v1372, %v1374
        %v1376 = vrot.slane %v1111, %v1375
        %vm1377 = vcmask 917312
        %v1378 = vsel %vm1377, %v1376, %v1371
        %v1379 = vadd.s32 %v1214, 4294967184
        %v1380 = vlaneseq
        %v1381 = vshrl.u32 %v1380, 7
        %v1382 = vsub.s32 %v1379, %v1381
        %v1383 = vrot.slane %v1113, %v1382
        %vm1384 = vcmask 982912
        %v1385 = vsel %vm1384, %v1383, %v1378
        %v1386 = vadd.s32 %v1214, 4294967176
        %v1387 = vlaneseq
        %v1388 = vshrl.u32 %v1387, 7
        %v1389 = vsub.s32 %v1386, %v1388
        %v1390 = vrot.slane %v1115, %v1389
        %vm1391 = vcmask 1048512
        %v1392 = vsel %vm1391, %v1390, %v1385
        %v1393 = vlaneseq
        %v1394 = vshrl.u32 %v1393, 7
        %v1395 = vsub.s32 %v1214, %v1394
        %v1396 = vrot.slane %v1117, %v1395
        %v1397 = vlaneseq
        %v1398 = vshrl.u32 %v1397, 7
        %v1399 = vsub.s32 %v1288, %v1398
        %v1400 = vrot.slane %v1119, %v1399
        %v1401 = vsel %vm1293, %v1400, %v1396
        %v1402 = vlaneseq
        %v1403 = vshrl.u32 %v1402, 7
        %v1404 = vsub.s32 %v1295, %v1403
        %v1405 = vrot.slane %v1121, %v1404
        %v1406 = vsel %vm1300, %v1405, %v1401
        %v1407 = vlaneseq
        %v1408 = vshrl.u32 %v1407, 7
        %v1409 = vsub.s32 %v1302, %v1408
        %v1410 = vrot.slane %v1123, %v1409
        %v1411 = vsel %vm1307, %v1410, %v1406
        %v1412 = vlaneseq
        %v1413 = vshrl.u32 %v1412, 7
        %v1414 = vsub.s32 %v1309, %v1413
        %v1415 = vrot.slane %v1125, %v1414
        %v1416 = vsel %vm1314, %v1415, %v1411
        %v1417 = vlaneseq
        %v1418 = vshrl.u32 %v1417, 7
        %v1419 = vsub.s32 %v1316, %v1418
        %v1420 = vrot.slane %v1127, %v1419
        %v1421 = vsel %vm1321, %v1420, %v1416
        %v1422 = vlaneseq
        %v1423 = vshrl.u32 %v1422, 7
        %v1424 = vsub.s32 %v1323, %v1423
        %v1425 = vrot.slane %v1129, %v1424
        %v1426 = vsel %vm1328, %v1425, %v1421
        %v1427 = vlaneseq
        %v1428 = vshrl.u32 %v1427, 7
        %v1429 = vsub.s32 %v1330, %v1428
        %v1430 = vrot.slane %v1131, %v1429
        %v1431 = vsel %vm1335, %v1430, %v1426
        %v1432 = vlaneseq
        %v1433 = vshrl.u32 %v1432, 7
        %v1434 = vsub.s32 %v1337, %v1433
        %v1435 = vrot.slane %v1133, %v1434
        %v1436 = vsel %vm1342, %v1435, %v1431
        %v1437 = vlaneseq
        %v1438 = vshrl.u32 %v1437, 7
        %v1439 = vsub.s32 %v1344, %v1438
        %v1440 = vrot.slane %v1135, %v1439
        %v1441 = vsel %vm1349, %v1440, %v1436
        %v1442 = vlaneseq
        %v1443 = vshrl.u32 %v1442, 7
        %v1444 = vsub.s32 %v1351, %v1443
        %v1445 = vrot.slane %v1137, %v1444
        %v1446 = vsel %vm1356, %v1445, %v1441
        %v1447 = vlaneseq
        %v1448 = vshrl.u32 %v1447, 7
        %v1449 = vsub.s32 %v1358, %v1448
        %v1450 = vrot.slane %v1139, %v1449
        %v1451 = vsel %vm1363, %v1450, %v1446
        %v1452 = vlaneseq
        %v1453 = vshrl.u32 %v1452, 7
        %v1454 = vsub.s32 %v1365, %v1453
        %v1455 = vrot.slane %v1141, %v1454
        %v1456 = vsel %vm1370, %v1455, %v1451
        %v1457 = vlaneseq
        %v1458 = vshrl.u32 %v1457, 7
        %v1459 = vsub.s32 %v1372, %v1458
        %v1460 = vrot.slane %v1143, %v1459
        %v1461 = vsel %vm1377, %v1460, %v1456
        %v1462 = vlaneseq
        %v1463 = vshrl.u32 %v1462, 7
        %v1464 = vsub.s32 %v1379, %v1463
        %v1465 = vrot.slane %v1145, %v1464
        %v1466 = vsel %vm1384, %v1465, %v1461
        %v1467 = vlaneseq
        %v1468 = vshrl.u32 %v1467, 7
        %v1469 = vsub.s32 %v1386, %v1468
        %v1470 = vrot.slane %v1147, %v1469
        %v1471 = vsel %vm1391, %v1470, %v1466
        %v1472 = vlaneseq
        %v1473 = vshrl.u32 %v1472, 7
        %v1474 = vsub.s32 %v1214, %v1473
        %v1475 = vrot.slane %v1149, %v1474
        %v1476 = vlaneseq
        %v1477 = vshrl.u32 %v1476, 7
        %v1478 = vsub.s32 %v1288, %v1477
        %v1479 = vrot.slane %v1151, %v1478
        %v1480 = vsel %vm1293, %v1479, %v1475
        %v1481 = vlaneseq
        %v1482 = vshrl.u32 %v1481, 7
        %v1483 = vsub.s32 %v1295, %v1482
        %v1484 = vrot.slane %v1153, %v1483
        %v1485 = vsel %vm1300, %v1484, %v1480
        %v1486 = vlaneseq
        %v1487 = vshrl.u32 %v1486, 7
        %v1488 = vsub.s32 %v1302, %v1487
        %v1489 = vrot.slane %v1155, %v1488
        %v1490 = vsel %vm1307, %v1489, %v1485
        %v1491 = vlaneseq
        %v1492 = vshrl.u32 %v1491, 7
        %v1493 = vsub.s32 %v1309, %v1492
        %v1494 = vrot.slane %v1157, %v1493
        %v1495 = vsel %vm1314, %v1494, %v1490
        %v1496 = vlaneseq
        %v1497 = vshrl.u32 %v1496, 7
        %v1498 = vsub.s32 %v1316, %v1497
        %v1499 = vrot.slane %v1159, %v1498
        %v1500 = vsel %vm1321, %v1499, %v1495
        %v1501 = vlaneseq
        %v1502 = vshrl.u32 %v1501, 7
        %v1503 = vsub.s32 %v1323, %v1502
        %v1504 = vrot.slane %v1161, %v1503
        %v1505 = vsel %vm1328, %v1504, %v1500
        %v1506 = vlaneseq
        %v1507 = vshrl.u32 %v1506, 7
        %v1508 = vsub.s32 %v1330, %v1507
        %v1509 = vrot.slane %v1163, %v1508
        %v1510 = vsel %vm1335, %v1509, %v1505
        %v1511 = vlaneseq
        %v1512 = vshrl.u32 %v1511, 7
        %v1513 = vsub.s32 %v1337, %v1512
        %v1514 = vrot.slane %v1165, %v1513
        %v1515 = vsel %vm1342, %v1514, %v1510
        %v1516 = vlaneseq
        %v1517 = vshrl.u32 %v1516, 7
        %v1518 = vsub.s32 %v1344, %v1517
        %v1519 = vrot.slane %v1167, %v1518
        %v1520 = vsel %vm1349, %v1519, %v1515
        %v1521 = vlaneseq
        %v1522 = vshrl.u32 %v1521, 7
        %v1523 = vsub.s32 %v1351, %v1522
        %v1524 = vrot.slane %v1169, %v1523
        %v1525 = vsel %vm1356, %v1524, %v1520
        %v1526 = vlaneseq
        %v1527 = vshrl.u32 %v1526, 7
        %v1528 = vsub.s32 %v1358, %v1527
        %v1529 = vrot.slane %v1171, %v1528
        %v1530 = vsel %vm1363, %v1529, %v1525
        %v1531 = vlaneseq
        %v1532 = vshrl.u32 %v1531, 7
        %v1533 = vsub.s32 %v1365, %v1532
        %v1534 = vrot.slane %v1173, %v1533
        %v1535 = vsel %vm1370, %v1534, %v1530
        %v1536 = vlaneseq
        %v1537 = vshrl.u32 %v1536, 7
        %v1538 = vsub.s32 %v1372, %v1537
        %v1539 = vrot.slane %v1175, %v1538
        %v1540 = vsel %vm1377, %v1539, %v1535
        %v1541 = vlaneseq
        %v1542 = vshrl.u32 %v1541, 7
        %v1543 = vsub.s32 %v1379, %v1542
        %v1544 = vrot.slane %v1177, %v1543
        %v1545 = vsel %vm1384, %v1544, %v1540
        %v1546 = vlaneseq
        %v1547 = vshrl.u32 %v1546, 7
        %v1548 = vsub.s32 %v1386, %v1547
        %v1549 = vrot.slane %v1179, %v1548
        %v1550 = vsel %vm1391, %v1549, %v1545
        %v1551 = vlaneseq
        %v1552 = vshrl.u32 %v1551, 7
        %v1553 = vsub.s32 %v1214, %v1552
        %v1554 = vrot.slane %v1181, %v1553
        %v1555 = vlaneseq
        %v1556 = vshrl.u32 %v1555, 7
        %v1557 = vsub.s32 %v1288, %v1556
        %v1558 = vrot.slane %v1183, %v1557
        %v1559 = vsel %vm1293, %v1558, %v1554
        %v1560 = vlaneseq
        %v1561 = vshrl.u32 %v1560, 7
        %v1562 = vsub.s32 %v1295, %v1561
        %v1563 = vrot.slane %v1185, %v1562
        %v1564 = vsel %vm1300, %v1563, %v1559
        %v1565 = vlaneseq
        %v1566 = vshrl.u32 %v1565, 7
        %v1567 = vsub.s32 %v1302, %v1566
        %v1568 = vrot.slane %v1187, %v1567
        %v1569 = vsel %vm1307, %v1568, %v1564
        %v1570 = vlaneseq
        %v1571 = vshrl.u32 %v1570, 7
        %v1572 = vsub.s32 %v1309, %v1571
        %v1573 = vrot.slane %v1189, %v1572
        %v1574 = vsel %vm1314, %v1573, %v1569
        %v1575 = vlaneseq
        %v1576 = vshrl.u32 %v1575, 7
        %v1577 = vsub.s32 %v1316, %v1576
        %v1578 = vrot.slane %v1191, %v1577
        %v1579 = vsel %vm1321, %v1578, %v1574
        %v1580 = vlaneseq
        %v1581 = vshrl.u32 %v1580, 7
        %v1582 = vsub.s32 %v1323, %v1581
        %v1583 = vrot.slane %v1193, %v1582
        %v1584 = vsel %vm1328, %v1583, %v1579
        %v1585 = vlaneseq
        %v1586 = vshrl.u32 %v1585, 7
        %v1587 = vsub.s32 %v1330, %v1586
        %v1588 = vrot.slane %v1195, %v1587
        %v1589 = vsel %vm1335, %v1588, %v1584
        %v1590 = vlaneseq
        %v1591 = vshrl.u32 %v1590, 7
        %v1592 = vsub.s32 %v1337, %v1591
        %v1593 = vrot.slane %v1197, %v1592
        %v1594 = vsel %vm1342, %v1593, %v1589
        %v1595 = vlaneseq
        %v1596 = vshrl.u32 %v1595, 7
        %v1597 = vsub.s32 %v1344, %v1596
        %v1598 = vrot.slane %v1199, %v1597
        %v1599 = vsel %vm1349, %v1598, %v1594
        %v1600 = vlaneseq
        %v1601 = vshrl.u32 %v1600, 7
        %v1602 = vsub.s32 %v1351, %v1601
        %v1603 = vrot.slane %v1201, %v1602
        %v1604 = vsel %vm1356, %v1603, %v1599
        %v1605 = vlaneseq
        %v1606 = vshrl.u32 %v1605, 7
        %v1607 = vsub.s32 %v1358, %v1606
        %v1608 = vrot.slane %v1203, %v1607
        %v1609 = vsel %vm1363, %v1608, %v1604
        %v1610 = vlaneseq
        %v1611 = vshrl.u32 %v1610, 7
        %v1612 = vsub.s32 %v1365, %v1611
        %v1613 = vrot.slane %v1205, %v1612
        %v1614 = vsel %vm1370, %v1613, %v1609
        %v1615 = vlaneseq
        %v1616 = vshrl.u32 %v1615, 7
        %v1617 = vsub.s32 %v1372, %v1616
        %v1618 = vrot.slane %v1207, %v1617
        %v1619 = vsel %vm1377, %v1618, %v1614
        %v1620 = vlaneseq
        %v1621 = vshrl.u32 %v1620, 7
        %v1622 = vsub.s32 %v1379, %v1621
        %v1623 = vrot.slane %v1209, %v1622
        %v1624 = vsel %vm1384, %v1623, %v1619
        %v1625 = vlaneseq
        %v1626 = vshrl.u32 %v1625, 7
        %v1627 = vsub.s32 %v1386, %v1626
        %v1628 = vrot.slane %v1211, %v1627
        %v1629 = vsel %vm1391, %v1628, %v1624
        %vm1630 = vcmask 1041409
        %v1631 = vsel %vm1630, %v1471, %v1392
        %vm1632 = vcmask 1042434
        %v1633 = vsel %vm1632, %v1550, %v1631
        %vm1634 = vcmask 1043459
        %v1635 = vsel %vm1634, %v1629, %v1633
        %v1637 = vsel %vm1219, %v1635, 0.0
        %v1638 = vld [vmem:[%s4] sm:$0xf]
        %vm1639 = vcmask 1043456
        %v1640 = vsel %vm1639, %v1637, 0.0
        %1641 = vadd.xlane.f32.xlu0 %v1640
        %v1642 = vpop.xlane.xlu0 %1641
        %v1643 = vadd.f32 %v1638, %v1642
        %vm1644 = vcmask 3072
        %1645 = vst.msk [vmem:[%s4] sm:$0xf] %vm1644, %v1643
        // Predicated region
        $region79: #{semantic_attention.2} parent=69 // pred_check
          %p1646 = pneg %p117
        $region80: #{semantic_attention.2} parent=69 // pred_check_branch
          %1648 = sbr.rel (%p1646) target = $region82
        $region81: #{semantic_attention.2} parent=69 // pred_region
          _
        $region82: #{semantic_attention.2} parent=69 // pred_fallthru
          _
        // Predicated region
        $region83: #{semantic_attention.2} parent=69 // pred_check
          %p1649 = pneg %p117
        $region84: #{semantic_attention.2} parent=69 // pred_check_branch
          %1651 = sbr.rel (%p1649) target = $region86
        $region85: #{semantic_attention.2} parent=69 // pred_region
          _
        $region86: #{semantic_attention.2} parent=69 // pred_fallthru
          _
      $region70: #{semantic_attention.2} parent=5 // pred_fallthru
        _
      %p1652 = scmp.le.s32.totalorder 2, %s10
      // Predicated region
      $region87: #{semantic_attention.2} parent=5 // pred_check
        %p1653 = pneg %p1652
      $region88: #{semantic_attention.2} parent=5 // pred_check_branch
        %1655 = sbr.rel (%p1653) target = $region90
      $region89: #{semantic_attention.2} parent=5 // pred_region
        %s1656 = ssub.s32 %s10, 2
      $region90: #{semantic_attention.2} parent=5 // pred_fallthru
        _
    $region6: #{semantic_attention.2} parent=1 // loop_footer
      %s14 = sadd.s32 1, %s10
    $region7: #{semantic_attention.2} parent=1 // loop_footer_branch
      %9 = sbr.rel target = $region3
    $region8: #{semantic_attention.2} parent=1 // loop_exit
      _

</llo_original>
